<compile_context>
chip_gen: v7x
topology: tpu7x:2x2x1
jax: 0.10.0
libtpu: 0.0.40
codegen_flags: <defaults>
</compile_context>

<pallas_src>
import functools

import jax
import jax.numpy as jnp
from jax import lax
from jax.experimental import pallas as pl
from jax.experimental.pallas import tpu as pltpu


def _gat_fused_kernel(x_ref, w_ref, msrc_ref, mdst_ref, adj_ref, out_ref,
                      *, heads, out_ch, neg_slope=0.2):
    x = x_ref[...]               # (N, Fin)
    w = w_ref[...]               # (Fin, H*C)
    m_src = msrc_ref[...]        # (H, H*C)  block-diagonal att_src
    m_dst = mdst_ref[...]        # (H*C, H)  block-diagonal att_dst
    adj_i8 = adj_ref[...]        # (N, N)    int8, 1 = edge j->i (incl. self-loop)

    # Fused projection for all heads on the MXU.
    h_all = jnp.dot(x, w, preferred_element_type=jnp.float32)           # (N, H*C)

    # Attention logit halves for all heads at once, on the MXU:
    #   a_dst[i, h] = <h_all[i, h*C:(h+1)*C], att_dst[h]>
    #   a_src[h, j] = <h_all[j, h*C:(h+1)*C], att_src[h]>   (transpose-free)
    a_dst = jnp.dot(h_all, m_dst, preferred_element_type=jnp.float32)   # (N, H)
    a_src = lax.dot_general(m_src, h_all, (((1,), (1,)), ((), ())),
                            preferred_element_type=jnp.float32)         # (H, N)

    # Additive mask computed once: 0 where edge, -1e30 where no edge.
    # (int8 -> f32 cast once; masked entries underflow to 0 after exp.)
    mask_add = jnp.where(adj_i8.astype(jnp.float32) > 0.5,
                         jnp.float32(0.0), jnp.float32(-1e30))           # (N, N)

    outs = []
    for h in range(heads):                       # static unroll over heads
        # e[i, j] = leaky_relu(a_dst[i, h] + a_src[h, j], 0.2), masked.
        e = a_dst[:, h:h + 1] + a_src[h:h + 1, :]                        # (N, N)
        e = jnp.where(e >= 0, e, neg_slope * e)
        e = e + mask_add

        # Row-wise softmax over source nodes j.
        m = jnp.max(e, axis=-1, keepdims=True)
        p = jnp.exp(e - m)
        s = jnp.sum(p, axis=-1, keepdims=True)
        attn = p * pl.reciprocal(s, approx=True)                         # EUP vrcp

        # Aggregate this head's values: (N, N) @ (N, C).
        h_head = h_all[:, h * out_ch:(h + 1) * out_ch]
        outs.append(jnp.dot(attn, h_head, preferred_element_type=jnp.float32))

    # Single lane-dense store of the concatenated heads: (N, H*C).
    out_ref[...] = outs[0] if heads == 1 else jnp.concatenate(outs, axis=-1)


def gat_conv(x, adj_i8, W, att_src, att_dst, bias, *, heads, out_ch, concat):
    """One GATConv layer (dense-adjacency formulation of PyG GATConv, inference)."""
    N, Fin = x.shape
    HC = heads * out_ch

    # Block-diagonal attention-vector matrices so a_src / a_dst for ALL heads
    # are two MXU matmuls instead of per-head multiply + cross-lane reduce.
    eye = jnp.eye(heads, dtype=jnp.float32)
    # m_src[h, h*C + c] = att_src[h, c], zeros elsewhere.
    m_src = (eye[:, :, None] * att_src[:, None, :]).reshape(heads, HC)   # (H, H*C)
    # m_dst[h*C + c, h] = att_dst[h, c], zeros elsewhere.
    m_dst = (eye[:, :, None] * att_dst[:, None, :]).reshape(heads, HC).T  # (H*C, H)

    # Advisory cost hint for XLA scheduling around the two layer calls.
    flops = (2 * N * Fin * HC                       # projection
             + 4 * N * HC * heads                   # a_src + a_dst
             + heads * (2 * N * N * out_ch + 6 * N * N))  # per-head attn + agg
    cost = pl.CostEstimate(
        flops=flops,
        transcendentals=heads * N * N,
        bytes_accessed=4 * (N * Fin + Fin * HC + 2 * heads * HC + N * HC) + N * N,
    )

    kernel = functools.partial(_gat_fused_kernel, heads=heads, out_ch=out_ch)

    out = pl.pallas_call(
        kernel,
        out_shape=jax.ShapeDtypeStruct((N, HC), jnp.float32),
        grid_spec=pl.GridSpec(
            grid=(1,),
            in_specs=[
                pl.BlockSpec((N, Fin), lambda i: (0, 0)),     # x
                pl.BlockSpec((Fin, HC), lambda i: (0, 0)),    # W (all heads)
                pl.BlockSpec((heads, HC), lambda i: (0, 0)),  # block-diag att_src
                pl.BlockSpec((HC, heads), lambda i: (0, 0)),  # block-diag att_dst
                pl.BlockSpec((N, N), lambda i: (0, 0)),       # adjacency (int8)
            ],
            out_specs=pl.BlockSpec((N, HC), lambda i: (0, 0)),
        ),
        compiler_params=pltpu.CompilerParams(
            dimension_semantics=("arbitrary",)),
        cost_estimate=cost,
    )(x, W, m_src, m_dst, adj_i8)                                         # (N, H*C)

    if not concat:
        # Mean over heads (heads=1 in conv2 -> identity, kept general).
        out = out.reshape(N, heads, out_ch).mean(axis=1)
    return out + bias


def gat_forward(x, adj_i8, params, out_channels):
    # conv1: GATConv(in_channels, 8, heads=8, dropout=0.6), concat=True
    h = gat_conv(x, adj_i8, params["W1"], params["as1"], params["ad1"],
                 params["b1"], heads=8, out_ch=8, concat=True)            # (N, 64)
    h = jax.nn.elu(h)
    # conv2: GATConv(64, out_channels, heads=1, concat=False, dropout=0.6)
    out = gat_conv(h, adj_i8, params["W2"], params["as2"], params["ad2"],
                   params["b2"], heads=1, out_ch=out_channels, concat=False)
    return out                                                            # (N, out_ch)


if __name__ == "__main__":
    N, IN_CH, OUT_CH, H1, C1 = 32, 16, 8, 8, 8
    NUM_EDGES = 64

    key = jax.random.PRNGKey(0)
    ks = jax.random.split(key, 10)

    # Node features and a deterministic random edge_index -> dense int8 adjacency.
    x = jax.random.normal(ks[0], (N, IN_CH), jnp.float32)
    src = jax.random.randint(ks[1], (NUM_EDGES,), 0, N)
    dst = jax.random.randint(ks[2], (NUM_EDGES,), 0, N)
    adj = jnp.zeros((N, N), jnp.int8).at[dst, src].set(1)     # adj[i,j]=1: edge j->i
    adj = jnp.maximum(adj, jnp.eye(N, dtype=jnp.int8))        # add self-loops

    params = {
        # conv1: lin (IN_CH -> H1*C1), att_src/att_dst (H1, C1), bias (H1*C1,)
        "W1":  0.1 * jax.random.normal(ks[3], (IN_CH, H1 * C1), jnp.float32),
        "as1": 0.1 * jax.random.normal(ks[4], (H1, C1), jnp.float32),
        "ad1": 0.1 * jax.random.normal(ks[5], (H1, C1), jnp.float32),
        "b1":  jnp.zeros((H1 * C1,), jnp.float32),
        # conv2: lin (64 -> OUT_CH), heads=1, concat=False -> bias (OUT_CH,)
        "W2":  0.1 * jax.random.normal(ks[6], (H1 * C1, OUT_CH), jnp.float32),
        "as2": 0.1 * jax.random.normal(ks[7], (1, OUT_CH), jnp.float32),
        "ad2": 0.1 * jax.random.normal(ks[8], (1, OUT_CH), jnp.float32),
        "b2":  jnp.zeros((OUT_CH,), jnp.float32),
    }

    out = gat_forward(x, adj, params, OUT_CH)
    jax.block_until_ready(out)
    assert out.shape == (N, OUT_CH) and out.dtype == jnp.float32
    print("KERNEL_OK")
</pallas_src>

<mosaic_0001>
module attributes {stable_mosaic.version = 11 : i64} {
  func.func @_gat_fused_kernel(%arg0: i32, %arg1: memref<32x16xf32, #tpu.memory_space<vmem>>, %arg2: memref<16x64xf32, #tpu.memory_space<vmem>>, %arg3: memref<8x64xf32, #tpu.memory_space<vmem>>, %arg4: memref<64x8xf32, #tpu.memory_space<vmem>>, %arg5: memref<32x32xi8, #tpu.memory_space<vmem>>, %arg6: memref<32x64xf32, #tpu.memory_space<vmem>>) attributes {dimension_semantics = [#tpu.dimension_semantics<arbitrary>], iteration_bounds = array<i64: 1>, scalar_prefetch = 0 : i64, scratch_operands = 0 : i64, tpu.core_type = #tpu.core_type<tc>, window_params = [{pipeline_mode = #tpu.pipeline_mode<synchronous>, transform_indices = @transform_0, window_bounds = array<i64: 32, 16>}, {pipeline_mode = #tpu.pipeline_mode<synchronous>, transform_indices = @transform_1, window_bounds = array<i64: 16, 64>}, {pipeline_mode = #tpu.pipeline_mode<synchronous>, transform_indices = @transform_2, window_bounds = array<i64: 8, 64>}, {pipeline_mode = #tpu.pipeline_mode<synchronous>, transform_indices = @transform_3, window_bounds = array<i64: 64, 8>}, {pipeline_mode = #tpu.pipeline_mode<synchronous>, transform_indices = @transform_4, window_bounds = array<i64: 32, 32>}, {pipeline_mode = #tpu.pipeline_mode<synchronous>, transform_indices = @transform_5, window_bounds = array<i64: 32, 64>}]} {
    %c0 = arith.constant 0 : index
    %c0_0 = arith.constant 0 : index
    %0 = vector.load %arg1[%c0, %c0_0] : memref<32x16xf32, #tpu.memory_space<vmem>>, vector<32x16xf32>
    %c0_1 = arith.constant 0 : index
    %c0_2 = arith.constant 0 : index
    %1 = vector.load %arg2[%c0_1, %c0_2] : memref<16x64xf32, #tpu.memory_space<vmem>>, vector<16x64xf32>
    %c0_3 = arith.constant 0 : index
    %c0_4 = arith.constant 0 : index
    %2 = vector.load %arg3[%c0_3, %c0_4] : memref<8x64xf32, #tpu.memory_space<vmem>>, vector<8x64xf32>
    %c0_5 = arith.constant 0 : index
    %c0_6 = arith.constant 0 : index
    %3 = vector.load %arg4[%c0_5, %c0_6] : memref<64x8xf32, #tpu.memory_space<vmem>>, vector<64x8xf32>
    %c0_7 = arith.constant 0 : index
    %c0_8 = arith.constant 0 : index
    %4 = vector.load %arg5[%c0_7, %c0_8] : memref<32x32xi8, #tpu.memory_space<vmem>>, vector<32x32xi8>
    %cst = arith.constant dense<0.000000e+00> : vector<32x64xf32>
    %5 = tpu.matmul %0, %1, %cst {dimension_numbers = #tpu.dot_dimension_numbers<[1], [0], [0], [1], [0, 0, 1, 1], [], []>} : vector<32x16xf32>, vector<16x64xf32>, vector<32x64xf32> -> vector<32x64xf32>
    %cst_9 = arith.constant dense<0.000000e+00> : vector<32x8xf32>
    %6 = tpu.matmul %5, %3, %cst_9 {dimension_numbers = #tpu.dot_dimension_numbers<[1], [0], [0], [1], [0, 0, 1, 1], [], []>} : vector<32x64xf32>, vector<64x8xf32>, vector<32x8xf32> -> vector<32x8xf32>
    %cst_10 = arith.constant dense<0.000000e+00> : vector<8x32xf32>
    %7 = tpu.matmul %2, %5, %cst_10 {dimension_numbers = #tpu.dot_dimension_numbers<[1], [1], [0], [0], [0, 0, 1, 0], [], []>} : vector<8x64xf32>, vector<32x64xf32>, vector<8x32xf32> -> vector<8x32xf32>
    %8 = arith.sitofp %4 : vector<32x32xi8> to vector<32x32xf32>
    %cst_11 = arith.constant 5.000000e-01 : f32
    %9 = vector.broadcast %cst_11 : f32 to vector<32x32xf32>
    %10 = arith.cmpf ogt, %8, %9 : vector<32x32xf32>
    %cst_12 = arith.constant 0.000000e+00 : f32
    %cst_13 = arith.constant -1.000000e+30 : f32
    %11 = vector.broadcast %cst_12 : f32 to vector<32x32xf32>
    %12 = vector.broadcast %cst_13 : f32 to vector<32x32xf32>
    %13 = arith.select %10, %11, %12 : vector<32x32xi1>, vector<32x32xf32>
    %14 = vector.extract_strided_slice %6 {offsets = [0, 0], sizes = [32, 1], strides = [1, 1]} : vector<32x8xf32> to vector<32x1xf32>
    %15 = vector.extract_strided_slice %7 {offsets = [0, 0], sizes = [1, 32], strides = [1, 1]} : vector<8x32xf32> to vector<1x32xf32>
    %16 = vector.broadcast %14 : vector<32x1xf32> to vector<32x32xf32>
    %17 = vector.broadcast %15 : vector<1x32xf32> to vector<32x32xf32>
    %18 = arith.addf %16, %17 : vector<32x32xf32>
    %cst_14 = arith.constant 0.000000e+00 : f32
    %19 = vector.broadcast %cst_14 : f32 to vector<32x32xf32>
    %20 = arith.cmpf oge, %18, %19 : vector<32x32xf32>
    %cst_15 = arith.constant 2.000000e-01 : f32
    %21 = vector.broadcast %cst_15 : f32 to vector<32x32xf32>
    %22 = arith.mulf %21, %18 : vector<32x32xf32>
    %23 = arith.select %20, %18, %22 : vector<32x32xi1>, vector<32x32xf32>
    %24 = arith.addf %23, %13 : vector<32x32xf32>
    %cst_16 = arith.constant dense<0xFF800000> : vector<32xf32>
    %25 = vector.multi_reduction <maximumf>, %24, %cst_16 [1] : vector<32x32xf32> to vector<32xf32>
    %26 = vector.shape_cast %25 : vector<32xf32> to vector<32x1xf32>
    %27 = vector.broadcast %26 : vector<32x1xf32> to vector<32x32xf32>
    %28 = arith.subf %24, %27 : vector<32x32xf32>
    %29 = math.exp %28 : vector<32x32xf32>
    %cst_17 = arith.constant dense<0.000000e+00> : vector<32xf32>
    %30 = vector.multi_reduction <add>, %29, %cst_17 [1] : vector<32x32xf32> to vector<32xf32>
    %31 = vector.shape_cast %30 : vector<32xf32> to vector<32x1xf32>
    %32 = tpu.reciprocal %31 {approx = true} : vector<32x1xf32> -> vector<32x1xf32>
    %33 = vector.broadcast %32 : vector<32x1xf32> to vector<32x32xf32>
    %34 = arith.mulf %29, %33 : vector<32x32xf32>
    %35 = vector.extract_strided_slice %5 {offsets = [0, 0], sizes = [32, 8], strides = [1, 1]} : vector<32x64xf32> to vector<32x8xf32>
    %cst_18 = arith.constant dense<0.000000e+00> : vector<32x8xf32>
    %36 = tpu.matmul %34, %35, %cst_18 {dimension_numbers = #tpu.dot_dimension_numbers<[1], [0], [0], [1], [0, 0, 1, 1], [], []>} : vector<32x32xf32>, vector<32x8xf32>, vector<32x8xf32> -> vector<32x8xf32>
    %37 = vector.extract_strided_slice %6 {offsets = [0, 1], sizes = [32, 1], strides = [1, 1]} : vector<32x8xf32> to vector<32x1xf32>
    %38 = vector.extract_strided_slice %7 {offsets = [1, 0], sizes = [1, 32], strides = [1, 1]} : vector<8x32xf32> to vector<1x32xf32>
    %39 = vector.broadcast %37 : vector<32x1xf32> to vector<32x32xf32>
    %40 = vector.broadcast %38 : vector<1x32xf32> to vector<32x32xf32>
    %41 = arith.addf %39, %40 : vector<32x32xf32>
    %cst_19 = arith.constant 0.000000e+00 : f32
    %42 = vector.broadcast %cst_19 : f32 to vector<32x32xf32>
    %43 = arith.cmpf oge, %41, %42 : vector<32x32xf32>
    %cst_20 = arith.constant 2.000000e-01 : f32
    %44 = vector.broadcast %cst_20 : f32 to vector<32x32xf32>
    %45 = arith.mulf %44, %41 : vector<32x32xf32>
    %46 = arith.select %43, %41, %45 : vector<32x32xi1>, vector<32x32xf32>
    %47 = arith.addf %46, %13 : vector<32x32xf32>
    %cst_21 = arith.constant dense<0xFF800000> : vector<32xf32>
    %48 = vector.multi_reduction <maximumf>, %47, %cst_21 [1] : vector<32x32xf32> to vector<32xf32>
    %49 = vector.shape_cast %48 : vector<32xf32> to vector<32x1xf32>
    %50 = vector.broadcast %49 : vector<32x1xf32> to vector<32x32xf32>
    %51 = arith.subf %47, %50 : vector<32x32xf32>
    %52 = math.exp %51 : vector<32x32xf32>
    %cst_22 = arith.constant dense<0.000000e+00> : vector<32xf32>
    %53 = vector.multi_reduction <add>, %52, %cst_22 [1] : vector<32x32xf32> to vector<32xf32>
    %54 = vector.shape_cast %53 : vector<32xf32> to vector<32x1xf32>
    %55 = tpu.reciprocal %54 {approx = true} : vector<32x1xf32> -> vector<32x1xf32>
    %56 = vector.broadcast %55 : vector<32x1xf32> to vector<32x32xf32>
    %57 = arith.mulf %52, %56 : vector<32x32xf32>
    %58 = vector.extract_strided_slice %5 {offsets = [0, 8], sizes = [32, 8], strides = [1, 1]} : vector<32x64xf32> to vector<32x8xf32>
    %cst_23 = arith.constant dense<0.000000e+00> : vector<32x8xf32>
    %59 = tpu.matmul %57, %58, %cst_23 {dimension_numbers = #tpu.dot_dimension_numbers<[1], [0], [0], [1], [0, 0, 1, 1], [], []>} : vector<32x32xf32>, vector<32x8xf32>, vector<32x8xf32> -> vector<32x8xf32>
    %60 = vector.extract_strided_slice %6 {offsets = [0, 2], sizes = [32, 1], strides = [1, 1]} : vector<32x8xf32> to vector<32x1xf32>
    %61 = vector.extract_strided_slice %7 {offsets = [2, 0], sizes = [1, 32], strides = [1, 1]} : vector<8x32xf32> to vector<1x32xf32>
    %62 = vector.broadcast %60 : vector<32x1xf32> to vector<32x32xf32>
    %63 = vector.broadcast %61 : vector<1x32xf32> to vector<32x32xf32>
    %64 = arith.addf %62, %63 : vector<32x32xf32>
    %cst_24 = arith.constant 0.000000e+00 : f32
    %65 = vector.broadcast %cst_24 : f32 to vector<32x32xf32>
    %66 = arith.cmpf oge, %64, %65 : vector<32x32xf32>
    %cst_25 = arith.constant 2.000000e-01 : f32
    %67 = vector.broadcast %cst_25 : f32 to vector<32x32xf32>
    %68 = arith.mulf %67, %64 : vector<32x32xf32>
    %69 = arith.select %66, %64, %68 : vector<32x32xi1>, vector<32x32xf32>
    %70 = arith.addf %69, %13 : vector<32x32xf32>
    %cst_26 = arith.constant dense<0xFF800000> : vector<32xf32>
    %71 = vector.multi_reduction <maximumf>, %70, %cst_26 [1] : vector<32x32xf32> to vector<32xf32>
    %72 = vector.shape_cast %71 : vector<32xf32> to vector<32x1xf32>
    %73 = vector.broadcast %72 : vector<32x1xf32> to vector<32x32xf32>
    %74 = arith.subf %70, %73 : vector<32x32xf32>
    %75 = math.exp %74 : vector<32x32xf32>
    %cst_27 = arith.constant dense<0.000000e+00> : vector<32xf32>
    %76 = vector.multi_reduction <add>, %75, %cst_27 [1] : vector<32x32xf32> to vector<32xf32>
    %77 = vector.shape_cast %76 : vector<32xf32> to vector<32x1xf32>
    %78 = tpu.reciprocal %77 {approx = true} : vector<32x1xf32> -> vector<32x1xf32>
    %79 = vector.broadcast %78 : vector<32x1xf32> to vector<32x32xf32>
    %80 = arith.mulf %75, %79 : vector<32x32xf32>
    %81 = vector.extract_strided_slice %5 {offsets = [0, 16], sizes = [32, 8], strides = [1, 1]} : vector<32x64xf32> to vector<32x8xf32>
    %cst_28 = arith.constant dense<0.000000e+00> : vector<32x8xf32>
    %82 = tpu.matmul %80, %81, %cst_28 {dimension_numbers = #tpu.dot_dimension_numbers<[1], [0], [0], [1], [0, 0, 1, 1], [], []>} : vector<32x32xf32>, vector<32x8xf32>, vector<32x8xf32> -> vector<32x8xf32>
    %83 = vector.extract_strided_slice %6 {offsets = [0, 3], sizes = [32, 1], strides = [1, 1]} : vector<32x8xf32> to vector<32x1xf32>
    %84 = vector.extract_strided_slice %7 {offsets = [3, 0], sizes = [1, 32], strides = [1, 1]} : vector<8x32xf32> to vector<1x32xf32>
    %85 = vector.broadcast %83 : vector<32x1xf32> to vector<32x32xf32>
    %86 = vector.broadcast %84 : vector<1x32xf32> to vector<32x32xf32>
    %87 = arith.addf %85, %86 : vector<32x32xf32>
    %cst_29 = arith.constant 0.000000e+00 : f32
    %88 = vector.broadcast %cst_29 : f32 to vector<32x32xf32>
    %89 = arith.cmpf oge, %87, %88 : vector<32x32xf32>
    %cst_30 = arith.constant 2.000000e-01 : f32
    %90 = vector.broadcast %cst_30 : f32 to vector<32x32xf32>
    %91 = arith.mulf %90, %87 : vector<32x32xf32>
    %92 = arith.select %89, %87, %91 : vector<32x32xi1>, vector<32x32xf32>
    %93 = arith.addf %92, %13 : vector<32x32xf32>
    %cst_31 = arith.constant dense<0xFF800000> : vector<32xf32>
    %94 = vector.multi_reduction <maximumf>, %93, %cst_31 [1] : vector<32x32xf32> to vector<32xf32>
    %95 = vector.shape_cast %94 : vector<32xf32> to vector<32x1xf32>
    %96 = vector.broadcast %95 : vector<32x1xf32> to vector<32x32xf32>
    %97 = arith.subf %93, %96 : vector<32x32xf32>
    %98 = math.exp %97 : vector<32x32xf32>
    %cst_32 = arith.constant dense<0.000000e+00> : vector<32xf32>
    %99 = vector.multi_reduction <add>, %98, %cst_32 [1] : vector<32x32xf32> to vector<32xf32>
    %100 = vector.shape_cast %99 : vector<32xf32> to vector<32x1xf32>
    %101 = tpu.reciprocal %100 {approx = true} : vector<32x1xf32> -> vector<32x1xf32>
    %102 = vector.broadcast %101 : vector<32x1xf32> to vector<32x32xf32>
    %103 = arith.mulf %98, %102 : vector<32x32xf32>
    %104 = vector.extract_strided_slice %5 {offsets = [0, 24], sizes = [32, 8], strides = [1, 1]} : vector<32x64xf32> to vector<32x8xf32>
    %cst_33 = arith.constant dense<0.000000e+00> : vector<32x8xf32>
    %105 = tpu.matmul %103, %104, %cst_33 {dimension_numbers = #tpu.dot_dimension_numbers<[1], [0], [0], [1], [0, 0, 1, 1], [], []>} : vector<32x32xf32>, vector<32x8xf32>, vector<32x8xf32> -> vector<32x8xf32>
    %106 = vector.extract_strided_slice %6 {offsets = [0, 4], sizes = [32, 1], strides = [1, 1]} : vector<32x8xf32> to vector<32x1xf32>
    %107 = vector.extract_strided_slice %7 {offsets = [4, 0], sizes = [1, 32], strides = [1, 1]} : vector<8x32xf32> to vector<1x32xf32>
    %108 = vector.broadcast %106 : vector<32x1xf32> to vector<32x32xf32>
    %109 = vector.broadcast %107 : vector<1x32xf32> to vector<32x32xf32>
    %110 = arith.addf %108, %109 : vector<32x32xf32>
    %cst_34 = arith.constant 0.000000e+00 : f32
    %111 = vector.broadcast %cst_34 : f32 to vector<32x32xf32>
    %112 = arith.cmpf oge, %110, %111 : vector<32x32xf32>
    %cst_35 = arith.constant 2.000000e-01 : f32
    %113 = vector.broadcast %cst_35 : f32 to vector<32x32xf32>
    %114 = arith.mulf %113, %110 : vector<32x32xf32>
    %115 = arith.select %112, %110, %114 : vector<32x32xi1>, vector<32x32xf32>
    %116 = arith.addf %115, %13 : vector<32x32xf32>
    %cst_36 = arith.constant dense<0xFF800000> : vector<32xf32>
    %117 = vector.multi_reduction <maximumf>, %116, %cst_36 [1] : vector<32x32xf32> to vector<32xf32>
    %118 = vector.shape_cast %117 : vector<32xf32> to vector<32x1xf32>
    %119 = vector.broadcast %118 : vector<32x1xf32> to vector<32x32xf32>
    %120 = arith.subf %116, %119 : vector<32x32xf32>
    %121 = math.exp %120 : vector<32x32xf32>
    %cst_37 = arith.constant dense<0.000000e+00> : vector<32xf32>
    %122 = vector.multi_reduction <add>, %121, %cst_37 [1] : vector<32x32xf32> to vector<32xf32>
    %123 = vector.shape_cast %122 : vector<32xf32> to vector<32x1xf32>
    %124 = tpu.reciprocal %123 {approx = true} : vector<32x1xf32> -> vector<32x1xf32>
    %125 = vector.broadcast %124 : vector<32x1xf32> to vector<32x32xf32>
    %126 = arith.mulf %121, %125 : vector<32x32xf32>
    %127 = vector.extract_strided_slice %5 {offsets = [0, 32], sizes = [32, 8], strides = [1, 1]} : vector<32x64xf32> to vector<32x8xf32>
    %cst_38 = arith.constant dense<0.000000e+00> : vector<32x8xf32>
    %128 = tpu.matmul %126, %127, %cst_38 {dimension_numbers = #tpu.dot_dimension_numbers<[1], [0], [0], [1], [0, 0, 1, 1], [], []>} : vector<32x32xf32>, vector<32x8xf32>, vector<32x8xf32> -> vector<32x8xf32>
    %129 = vector.extract_strided_slice %6 {offsets = [0, 5], sizes = [32, 1], strides = [1, 1]} : vector<32x8xf32> to vector<32x1xf32>
    %130 = vector.extract_strided_slice %7 {offsets = [5, 0], sizes = [1, 32], strides = [1, 1]} : vector<8x32xf32> to vector<1x32xf32>
    %131 = vector.broadcast %129 : vector<32x1xf32> to vector<32x32xf32>
    %132 = vector.broadcast %130 : vector<1x32xf32> to vector<32x32xf32>
    %133 = arith.addf %131, %132 : vector<32x32xf32>
    %cst_39 = arith.constant 0.000000e+00 : f32
    %134 = vector.broadcast %cst_39 : f32 to vector<32x32xf32>
    %135 = arith.cmpf oge, %133, %134 : vector<32x32xf32>
    %cst_40 = arith.constant 2.000000e-01 : f32
    %136 = vector.broadcast %cst_40 : f32 to vector<32x32xf32>
    %137 = arith.mulf %136, %133 : vector<32x32xf32>
    %138 = arith.select %135, %133, %137 : vector<32x32xi1>, vector<32x32xf32>
    %139 = arith.addf %138, %13 : vector<32x32xf32>
    %cst_41 = arith.constant dense<0xFF800000> : vector<32xf32>
    %140 = vector.multi_reduction <maximumf>, %139, %cst_41 [1] : vector<32x32xf32> to vector<32xf32>
    %141 = vector.shape_cast %140 : vector<32xf32> to vector<32x1xf32>
    %142 = vector.broadcast %141 : vector<32x1xf32> to vector<32x32xf32>
    %143 = arith.subf %139, %142 : vector<32x32xf32>
    %144 = math.exp %143 : vector<32x32xf32>
    %cst_42 = arith.constant dense<0.000000e+00> : vector<32xf32>
    %145 = vector.multi_reduction <add>, %144, %cst_42 [1] : vector<32x32xf32> to vector<32xf32>
    %146 = vector.shape_cast %145 : vector<32xf32> to vector<32x1xf32>
    %147 = tpu.reciprocal %146 {approx = true} : vector<32x1xf32> -> vector<32x1xf32>
    %148 = vector.broadcast %147 : vector<32x1xf32> to vector<32x32xf32>
    %149 = arith.mulf %144, %148 : vector<32x32xf32>
    %150 = vector.extract_strided_slice %5 {offsets = [0, 40], sizes = [32, 8], strides = [1, 1]} : vector<32x64xf32> to vector<32x8xf32>
    %cst_43 = arith.constant dense<0.000000e+00> : vector<32x8xf32>
    %151 = tpu.matmul %149, %150, %cst_43 {dimension_numbers = #tpu.dot_dimension_numbers<[1], [0], [0], [1], [0, 0, 1, 1], [], []>} : vector<32x32xf32>, vector<32x8xf32>, vector<32x8xf32> -> vector<32x8xf32>
    %152 = vector.extract_strided_slice %6 {offsets = [0, 6], sizes = [32, 1], strides = [1, 1]} : vector<32x8xf32> to vector<32x1xf32>
    %153 = vector.extract_strided_slice %7 {offsets = [6, 0], sizes = [1, 32], strides = [1, 1]} : vector<8x32xf32> to vector<1x32xf32>
    %154 = vector.broadcast %152 : vector<32x1xf32> to vector<32x32xf32>
    %155 = vector.broadcast %153 : vector<1x32xf32> to vector<32x32xf32>
    %156 = arith.addf %154, %155 : vector<32x32xf32>
    %cst_44 = arith.constant 0.000000e+00 : f32
    %157 = vector.broadcast %cst_44 : f32 to vector<32x32xf32>
    %158 = arith.cmpf oge, %156, %157 : vector<32x32xf32>
    %cst_45 = arith.constant 2.000000e-01 : f32
    %159 = vector.broadcast %cst_45 : f32 to vector<32x32xf32>
    %160 = arith.mulf %159, %156 : vector<32x32xf32>
    %161 = arith.select %158, %156, %160 : vector<32x32xi1>, vector<32x32xf32>
    %162 = arith.addf %161, %13 : vector<32x32xf32>
    %cst_46 = arith.constant dense<0xFF800000> : vector<32xf32>
    %163 = vector.multi_reduction <maximumf>, %162, %cst_46 [1] : vector<32x32xf32> to vector<32xf32>
    %164 = vector.shape_cast %163 : vector<32xf32> to vector<32x1xf32>
    %165 = vector.broadcast %164 : vector<32x1xf32> to vector<32x32xf32>
    %166 = arith.subf %162, %165 : vector<32x32xf32>
    %167 = math.exp %166 : vector<32x32xf32>
    %cst_47 = arith.constant dense<0.000000e+00> : vector<32xf32>
    %168 = vector.multi_reduction <add>, %167, %cst_47 [1] : vector<32x32xf32> to vector<32xf32>
    %169 = vector.shape_cast %168 : vector<32xf32> to vector<32x1xf32>
    %170 = tpu.reciprocal %169 {approx = true} : vector<32x1xf32> -> vector<32x1xf32>
    %171 = vector.broadcast %170 : vector<32x1xf32> to vector<32x32xf32>
    %172 = arith.mulf %167, %171 : vector<32x32xf32>
    %173 = vector.extract_strided_slice %5 {offsets = [0, 48], sizes = [32, 8], strides = [1, 1]} : vector<32x64xf32> to vector<32x8xf32>
    %cst_48 = arith.constant dense<0.000000e+00> : vector<32x8xf32>
    %174 = tpu.matmul %172, %173, %cst_48 {dimension_numbers = #tpu.dot_dimension_numbers<[1], [0], [0], [1], [0, 0, 1, 1], [], []>} : vector<32x32xf32>, vector<32x8xf32>, vector<32x8xf32> -> vector<32x8xf32>
    %175 = vector.extract_strided_slice %6 {offsets = [0, 7], sizes = [32, 1], strides = [1, 1]} : vector<32x8xf32> to vector<32x1xf32>
    %176 = vector.extract_strided_slice %7 {offsets = [7, 0], sizes = [1, 32], strides = [1, 1]} : vector<8x32xf32> to vector<1x32xf32>
    %177 = vector.broadcast %175 : vector<32x1xf32> to vector<32x32xf32>
    %178 = vector.broadcast %176 : vector<1x32xf32> to vector<32x32xf32>
    %179 = arith.addf %177, %178 : vector<32x32xf32>
    %cst_49 = arith.constant 0.000000e+00 : f32
    %180 = vector.broadcast %cst_49 : f32 to vector<32x32xf32>
    %181 = arith.cmpf oge, %179, %180 : vector<32x32xf32>
    %cst_50 = arith.constant 2.000000e-01 : f32
    %182 = vector.broadcast %cst_50 : f32 to vector<32x32xf32>
    %183 = arith.mulf %182, %179 : vector<32x32xf32>
    %184 = arith.select %181, %179, %183 : vector<32x32xi1>, vector<32x32xf32>
    %185 = arith.addf %184, %13 : vector<32x32xf32>
    %cst_51 = arith.constant dense<0xFF800000> : vector<32xf32>
    %186 = vector.multi_reduction <maximumf>, %185, %cst_51 [1] : vector<32x32xf32> to vector<32xf32>
    %187 = vector.shape_cast %186 : vector<32xf32> to vector<32x1xf32>
    %188 = vector.broadcast %187 : vector<32x1xf32> to vector<32x32xf32>
    %189 = arith.subf %185, %188 : vector<32x32xf32>
    %190 = math.exp %189 : vector<32x32xf32>
    %cst_52 = arith.constant dense<0.000000e+00> : vector<32xf32>
    %191 = vector.multi_reduction <add>, %190, %cst_52 [1] : vector<32x32xf32> to vector<32xf32>
    %192 = vector.shape_cast %191 : vector<32xf32> to vector<32x1xf32>
    %193 = tpu.reciprocal %192 {approx = true} : vector<32x1xf32> -> vector<32x1xf32>
    %194 = vector.broadcast %193 : vector<32x1xf32> to vector<32x32xf32>
    %195 = arith.mulf %190, %194 : vector<32x32xf32>
    %196 = vector.extract_strided_slice %5 {offsets = [0, 56], sizes = [32, 8], strides = [1, 1]} : vector<32x64xf32> to vector<32x8xf32>
    %cst_53 = arith.constant dense<0.000000e+00> : vector<32x8xf32>
    %197 = tpu.matmul %195, %196, %cst_53 {dimension_numbers = #tpu.dot_dimension_numbers<[1], [0], [0], [1], [0, 0, 1, 1], [], []>} : vector<32x32xf32>, vector<32x8xf32>, vector<32x8xf32> -> vector<32x8xf32>
    %198 = tpu.concatenate %36, %59, %82, %105, %128, %151, %174, %197 in 1 : vector<32x8xf32>, vector<32x8xf32>, vector<32x8xf32>, vector<32x8xf32>, vector<32x8xf32>, vector<32x8xf32>, vector<32x8xf32>, vector<32x8xf32> -> vector<32x64xf32>
    %c0_54 = arith.constant 0 : index
    %c0_55 = arith.constant 0 : index
    %199 = vector.load %arg6[%c0_54, %c0_55] : memref<32x64xf32, #tpu.memory_space<vmem>>, vector<32x64xf32>
    tpu.vector_store %arg6[%c0_54, %c0_55], %198 {strides = array<i32>} : memref<32x64xf32, #tpu.memory_space<vmem>>, vector<32x64xf32>,
    return
  }
  func.func @transform_0(%arg0: i32) -> (i32, i32) {
    %c0_i32 = arith.constant 0 : i32
    %c0_i32_0 = arith.constant 0 : i32
    %c0_i32_1 = arith.constant 0 : i32
    return %c0_i32, %c0_i32_0 : i32, i32
  }
  func.func @transform_1(%arg0: i32) -> (i32, i32) {
    %c0_i32 = arith.constant 0 : i32
    %c0_i32_0 = arith.constant 0 : i32
    %c0_i32_1 = arith.constant 0 : i32
    return %c0_i32, %c0_i32_0 : i32, i32
  }
  func.func @transform_2(%arg0: i32) -> (i32, i32) {
    %c0_i32 = arith.constant 0 : i32
    %c0_i32_0 = arith.constant 0 : i32
    %c0_i32_1 = arith.constant 0 : i32
    return %c0_i32, %c0_i32_0 : i32, i32
  }
  func.func @transform_3(%arg0: i32) -> (i32, i32) {
    %c0_i32 = arith.constant 0 : i32
    %c0_i32_0 = arith.constant 0 : i32
    %c0_i32_1 = arith.constant 0 : i32
    return %c0_i32, %c0_i32_0 : i32, i32
  }
  func.func @transform_4(%arg0: i32) -> (i32, i32) {
    %c0_i32 = arith.constant 0 : i32
    %c0_i32_0 = arith.constant 0 : i32
    %c0_i32_1 = arith.constant 0 : i32
    return %c0_i32, %c0_i32_0 : i32, i32
  }
  func.func @transform_5(%arg0: i32) -> (i32, i32) {
    %c0_i32 = arith.constant 0 : i32
    %c0_i32_0 = arith.constant 0 : i32
    %c0_i32_1 = arith.constant 0 : i32
    return %c0_i32, %c0_i32_0 : i32, i32
  }
}

</mosaic_0001>

<llo_original>
// kernel: tpu_custom_call.1
$region0: #{tpu_custom_call.1}
  #allocation0 [shape = 'u32[]', space=smem, size = 0x4, offset = 0x4, fixed_abs, tag = 'smem constant byte address 0x4 - core index']
  #allocation1 [shape = 'u32[144,128]{1,0:T(1,128)}', space=vmem, size = 0x12000, scoped, tag = 'internal scratch']
  %s0 = inlined_call_operand.vmem [shape: f32[32,16], index: 0, kind: input, shape index: {}]
  %s1 = inlined_call_operand.vmem [shape: f32[16,64], index: 1, kind: input, shape index: {}]
  %s2 = inlined_call_operand.vmem [shape: f32[8,64], index: 2, kind: input, shape index: {}]
  %s3 = inlined_call_operand.vmem [shape: f32[64,8], index: 3, kind: input, shape index: {}]
  %s4 = inlined_call_operand.vmem [shape: s8[32,32], index: 4, kind: input, shape index: {}]
  %s5 = inlined_call_operand.hbm [shape: f32[32,64], index: 5, kind: output, shape index: {}]
  %s6 = sld [smem:[#allocation0]]
  $region30: #{tpu_custom_call.1} parent=0
    _
  %s8 = ssub.s32 1, %s6
  %s9 = scalar_select 0, %s8, %s6
  $region1: #{tpu_custom_call.1} parent=0
    #allocation2 [shape = 'u8[16384]{0}', space=vmem, size = 0x4000, scoped, tag = 'output window, operand 0, single buffered']
    #allocation3 [shape = 's32[1]{0}', space=sflag, size = 0x4, scoped, tag = 'scoped memory for tpu_custom_call.1']
    %10 = vsyncpa [#allocation3], 0
    // Predicated region
    $region2: #{tpu_custom_call.1} parent=1 // pred_check
      _
    $region3: #{tpu_custom_call.1} parent=1 // pred_check_branch
      %12 = sbr.rel (0) target = $region5
    $region4: #{tpu_custom_call.1} parent=1 // pred_region
      _
    $region5: #{tpu_custom_call.1} parent=1 // pred_fallthru
      _
    // Predicated region
    $region6: #{tpu_custom_call.1} parent=1 // pred_check
      _
    $region7: #{tpu_custom_call.1} parent=1 // pred_check_branch
      %14 = sbr.rel (0) target = $region9
    $region8: #{tpu_custom_call.1} parent=1 // pred_region
      _
    $region9: #{tpu_custom_call.1} parent=1 // pred_fallthru
      _
    // Predicated region
    $region10: #{tpu_custom_call.1} parent=1 // pred_check
      _
    $region11: #{tpu_custom_call.1} parent=1 // pred_check_branch
      %16 = sbr.rel (0) target = $region13
    $region12: #{tpu_custom_call.1} parent=1 // pred_region
      _
    $region13: #{tpu_custom_call.1} parent=1 // pred_fallthru
      _
    // Predicated region
    $region14: #{tpu_custom_call.1} parent=1 // pred_check
      _
    $region15: #{tpu_custom_call.1} parent=1 // pred_check_branch
      %18 = sbr.rel (0) target = $region17
    $region16: #{tpu_custom_call.1} parent=1 // pred_region
      _
    $region17: #{tpu_custom_call.1} parent=1 // pred_fallthru
      _
    // Predicated region
    $region18: #{tpu_custom_call.1} parent=1 // pred_check
      _
    $region19: #{tpu_custom_call.1} parent=1 // pred_check_branch
      %20 = sbr.rel (0) target = $region21
    $region20: #{tpu_custom_call.1} parent=1 // pred_region
      _
    $region21: #{tpu_custom_call.1} parent=1 // pred_fallthru
      _
    %v21 = vld [vmem:[%s0] sm:$0xff]
    %v22 = vld [vmem:[%s0 + $0x8] sm:$0xff]
    %v23 = vld [vmem:[%s0 + $0x10] sm:$0xff]
    %v24 = vld [vmem:[%s0 + $0x18] sm:$0xff]
    %v25 = vld [vmem:[%s1] sm:$0xff]
    %v26 = vld [vmem:[%s1 + $0x8] sm:$0xff]
    %v27 = vld [vmem:[%s2] sm:$0xff]
    %v28 = vld [vmem:[%s3] sm:$0xff]
    %v29 = vld [vmem:[%s3 + $0x8] sm:$0xff]
    %v30 = vld [vmem:[%s3 + $0x10] sm:$0xff]
    %v31 = vld [vmem:[%s3 + $0x18] sm:$0xff]
    %v32 = vld [vmem:[%s3 + $0x20] sm:$0xff]
    %v33 = vld [vmem:[%s3 + $0x28] sm:$0xff]
    %v34 = vld [vmem:[%s3 + $0x30] sm:$0xff]
    %v35 = vld [vmem:[%s3 + $0x38] sm:$0xff]
    %v36 = vld [vmem:[%s4] sm:$0xff]
    %vm37 = vcmask 130048
    %v39 = vsel %vm37, %v21, 0
    %v42 = vsel %vm37, %v22, 0
    %v45 = vsel %vm37, %v23, 0
    %v48 = vsel %vm37, %v24, 0
    %50 = vmatprep.subr.mxu0 0.0
    %51 = vmatpush1.msra.mxu0 %v25
    %52 = vmatprep.subr.mxu0 0.0
    %53 = vmatpush1.msra.mxu0 %v26
    %54 = vmatprep.subr.mxu0 0.0
    %55 = vmatpush1.msra.mxu0 0.0
    %56 = vmatprep.subr.mxu0 0.0
    %57 = vmatpush1.msra.mxu0 0.0
    %58 = vmatprep.subr.mxu0 0.0
    %59 = vmatpush1.msra.mxu0 0.0
    %60 = vmatprep.subr.mxu0 0.0
    %61 = vmatpush1.msra.mxu0 0.0
    %62 = vmatprep.subr.mxu0 0.0
    %63 = vmatpush1.msra.mxu0 0.0
    %64 = vmatprep.subr.mxu0 0.0
    %65 = vmatpush1.msra.mxu0 0.0
    %66 = vmatprep.subr.mxu0 0.0
    %67 = vmatpush1.msra.mxu0 0.0
    %68 = vmatprep.subr.mxu0 0.0
    %69 = vmatpush1.msra.mxu0 0.0
    %70 = vmatprep.subr.mxu0 0.0
    %71 = vmatpush1.msra.mxu0 0.0
    %72 = vmatprep.subr.mxu0 0.0
    %73 = vmatpush1.msra.mxu0 0.0
    %74 = vmatprep.subr.mxu0 0.0
    %75 = vmatpush1.msra.mxu0 0.0
    %76 = vmatprep.subr.mxu0 0.0
    %77 = vmatpush1.msra.mxu0 0.0
    %78 = vmatprep.subr.mxu0 0.0
    %79 = vmatpush1.msra.mxu0 0.0
    %80 = vmatprep.subr.mxu0 0.0
    %81 = vmatpush1.msra.mxu0 0.0
    %82 = vmatprep.subr.mxu0 0.0
    %83 = vmatpush1.msra.mxu0 0.0
    %84 = vmatprep.subr.mxu0 0.0
    %85 = vmatpush1.msra.mxu0 0.0
    %86 = vmatprep.subr.mxu0 0.0
    %87 = vmatpush1.msra.mxu0 0.0
    %88 = vmatprep.subr.mxu0 0.0
    %89 = vmatpush1.msra.mxu0 0.0
    %90 = vmatprep.subr.mxu0 0.0
    %91 = vmatpush1.msra.mxu0 0.0
    %92 = vmatprep.subr.mxu0 0.0
    %93 = vmatpush1.msra.mxu0 0.0
    %94 = vmatprep.subr.mxu0 0.0
    %95 = vmatpush1.msra.mxu0 0.0
    %96 = vmatprep.subr.mxu0 0.0
    %97 = vmatpush1.msra.mxu0 0.0
    %98 = vmatprep.subr.mxu0 0.0
    %99 = vmatpush1.msra.mxu0 0.0
    %100 = vmatprep.subr.mxu0 0.0
    %101 = vmatpush1.msra.mxu0 0.0
    %102 = vmatprep.subr.mxu0 0.0
    %103 = vmatpush1.msra.mxu0 0.0
    %104 = vmatprep.subr.mxu0 0.0
    %105 = vmatpush1.msra.mxu0 0.0
    %106 = vmatprep.subr.mxu0 0.0
    %107 = vmatpush1.msra.mxu0 0.0
    %108 = vmatprep.subr.mxu0 0.0
    %109 = vmatpush1.msra.mxu0 0.0
    %110 = vmatprep.subr.mxu0 0.0
    %111 = vmatpush1.msra.mxu0 0.0
    %112 = vmatprep.subr.mxu0 0.0
    %113 = vmatpush1.msra.mxu0 0.0
    %114 = vmatprep.mubr.f32.mxu0 0.0
    %115 = vmatmul.mubr.f32.gmra.mrb[0].mxu0 %v39
    %v116 = vpop.f32.mrb[0].mxu0
    %v117 = vadd.f32 0.0, %v116
    %v118 = vpop.f32.mrb[0].mxu0
    %119 = vmatprep.mubr.f32.mxu0 0.0
    %120 = vmatmul.mubr.f32.gmra.mrb[0].mxu0 %v42
    %v121 = vpop.f32.mrb[0].mxu0
    %v122 = vadd.f32 0.0, %v121
    %v123 = vpop.f32.mrb[0].mxu0
    %124 = vmatprep.mubr.f32.mxu0 0.0
    %125 = vmatmul.mubr.f32.gmra.mrb[0].mxu0 %v45
    %v126 = vpop.f32.mrb[0].mxu0
    %v127 = vadd.f32 0.0, %v126
    %v128 = vpop.f32.mrb[0].mxu0
    %129 = vmatprep.mubr.f32.mxu0 0.0
    %130 = vmatmul.mubr.f32.gmra.mrb[0].mxu0 %v48
    %v131 = vpop.f32.mrb[0].mxu0
    %v132 = vadd.f32 0.0, %v131
    %v133 = vpop.f32.mrb[0].mxu0
    %134 = vdwg.mxu0
    %vm135 = vcmask 523264
    %v137 = vsel %vm135, %v117, 0
    %v140 = vsel %vm135, %v122, 0
    %v143 = vsel %vm135, %v127, 0
    %v146 = vsel %vm135, %v132, 0
    %148 = vmatprep.subr.mxu0 0.0
    %149 = vmatpush1.msra.mxu0 %v28
    %150 = vmatprep.subr.mxu0 0.0
    %151 = vmatpush1.msra.mxu0 %v29
    %152 = vmatprep.subr.mxu0 0.0
    %153 = vmatpush1.msra.mxu0 %v30
    %154 = vmatprep.subr.mxu0 0.0
    %155 = vmatpush1.msra.mxu0 %v31
    %156 = vmatprep.subr.mxu0 0.0
    %157 = vmatpush1.msra.mxu0 %v32
    %158 = vmatprep.subr.mxu0 0.0
    %159 = vmatpush1.msra.mxu0 %v33
    %160 = vmatprep.subr.mxu0 0.0
    %161 = vmatpush1.msra.mxu0 %v34
    %162 = vmatprep.subr.mxu0 0.0
    %163 = vmatpush1.msra.mxu0 %v35
    %164 = vmatprep.subr.mxu0 0.0
    %165 = vmatpush1.msra.mxu0 0.0
    %166 = vmatprep.subr.mxu0 0.0
    %167 = vmatpush1.msra.mxu0 0.0
    %168 = vmatprep.subr.mxu0 0.0
    %169 = vmatpush1.msra.mxu0 0.0
    %170 = vmatprep.subr.mxu0 0.0
    %171 = vmatpush1.msra.mxu0 0.0
    %172 = vmatprep.subr.mxu0 0.0
    %173 = vmatpush1.msra.mxu0 0.0
    %174 = vmatprep.subr.mxu0 0.0
    %175 = vmatpush1.msra.mxu0 0.0
    %176 = vmatprep.subr.mxu0 0.0
    %177 = vmatpush1.msra.mxu0 0.0
    %178 = vmatprep.subr.mxu0 0.0
    %179 = vmatpush1.msra.mxu0 0.0
    %180 = vmatprep.subr.mxu0 0.0
    %181 = vmatpush1.msra.mxu0 0.0
    %182 = vmatprep.subr.mxu0 0.0
    %183 = vmatpush1.msra.mxu0 0.0
    %184 = vmatprep.subr.mxu0 0.0
    %185 = vmatpush1.msra.mxu0 0.0
    %186 = vmatprep.subr.mxu0 0.0
    %187 = vmatpush1.msra.mxu0 0.0
    %188 = vmatprep.subr.mxu0 0.0
    %189 = vmatpush1.msra.mxu0 0.0
    %190 = vmatprep.subr.mxu0 0.0
    %191 = vmatpush1.msra.mxu0 0.0
    %192 = vmatprep.subr.mxu0 0.0
    %193 = vmatpush1.msra.mxu0 0.0
    %194 = vmatprep.subr.mxu0 0.0
    %195 = vmatpush1.msra.mxu0 0.0
    %196 = vmatprep.subr.mxu0 0.0
    %197 = vmatpush1.msra.mxu0 0.0
    %198 = vmatprep.subr.mxu0 0.0
    %199 = vmatpush1.msra.mxu0 0.0
    %200 = vmatprep.subr.mxu0 0.0
    %201 = vmatpush1.msra.mxu0 0.0
    %202 = vmatprep.subr.mxu0 0.0
    %203 = vmatpush1.msra.mxu0 0.0
    %204 = vmatprep.subr.mxu0 0.0
    %205 = vmatpush1.msra.mxu0 0.0
    %206 = vmatprep.subr.mxu0 0.0
    %207 = vmatpush1.msra.mxu0 0.0
    %208 = vmatprep.subr.mxu0 0.0
    %209 = vmatpush1.msra.mxu0 0.0
    %210 = vmatprep.subr.mxu0 0.0
    %211 = vmatpush1.msra.mxu0 0.0
    %212 = vmatprep.mubr.f32.mxu0 0.0
    %213 = vmatmul.mubr.f32.gmra.mrb[0].mxu0 %v137
    %v214 = vpop.f32.mrb[0].mxu0
    %v215 = vadd.f32 0.0, %v214
    %v216 = vpop.f32.mrb[0].mxu0
    %217 = vmatprep.mubr.f32.mxu0 0.0
    %218 = vmatmul.mubr.f32.gmra.mrb[0].mxu0 %v140
    %v219 = vpop.f32.mrb[0].mxu0
    %v220 = vadd.f32 0.0, %v219
    %v221 = vpop.f32.mrb[0].mxu0
    %222 = vmatprep.mubr.f32.mxu0 0.0
    %223 = vmatmul.mubr.f32.gmra.mrb[0].mxu0 %v143
    %v224 = vpop.f32.mrb[0].mxu0
    %v225 = vadd.f32 0.0, %v224
    %v226 = vpop.f32.mrb[0].mxu0
    %227 = vmatprep.mubr.f32.mxu0 0.0
    %228 = vmatmul.mubr.f32.gmra.mrb[0].mxu0 %v146
    %v229 = vpop.f32.mrb[0].mxu0
    %v230 = vadd.f32 0.0, %v229
    %v231 = vpop.f32.mrb[0].mxu0
    %232 = vdwg.mxu0
    %v234 = vsel %vm135, %v27, 0
    %236 = vmatprep.subr.mxu0 0.0
    %237 = vmatpush1.xpose.msra.mxu0 %v137
    %238 = vmatprep.subr.mxu0 0.0
    %239 = vmatpush1.xpose.msra.mxu0 %v140
    %240 = vmatprep.subr.mxu0 0.0
    %241 = vmatpush1.xpose.msra.mxu0 %v143
    %242 = vmatprep.subr.mxu0 0.0
    %243 = vmatpush1.xpose.msra.mxu0 %v146
    %244 = vmatprep.subr.mxu0 0.0
    %245 = vmatpush1.xpose.msra.mxu0 0.0
    %246 = vmatprep.subr.mxu0 0.0
    %247 = vmatpush1.xpose.msra.mxu0 0.0
    %248 = vmatprep.subr.mxu0 0.0
    %249 = vmatpush1.xpose.msra.mxu0 0.0
    %250 = vmatprep.subr.mxu0 0.0
    %251 = vmatpush1.xpose.msra.mxu0 0.0
    %252 = vmatprep.subr.mxu0 0.0
    %253 = vmatpush1.xpose.msra.mxu0 0.0
    %254 = vmatprep.subr.mxu0 0.0
    %255 = vmatpush1.xpose.msra.mxu0 0.0
    %256 = vmatprep.subr.mxu0 0.0
    %257 = vmatpush1.xpose.msra.mxu0 0.0
    %258 = vmatprep.subr.mxu0 0.0
    %259 = vmatpush1.xpose.msra.mxu0 0.0
    %260 = vmatprep.subr.mxu0 0.0
    %261 = vmatpush1.xpose.msra.mxu0 0.0
    %262 = vmatprep.subr.mxu0 0.0
    %263 = vmatpush1.xpose.msra.mxu0 0.0
    %264 = vmatprep.subr.mxu0 0.0
    %265 = vmatpush1.xpose.msra.mxu0 0.0
    %266 = vmatprep.subr.mxu0 0.0
    %267 = vmatpush1.xpose.msra.mxu0 0.0
    %268 = vmatprep.subr.mxu0 0.0
    %269 = vmatpush1.xpose.msra.mxu0 0.0
    %270 = vmatprep.subr.mxu0 0.0
    %271 = vmatpush1.xpose.msra.mxu0 0.0
    %272 = vmatprep.subr.mxu0 0.0
    %273 = vmatpush1.xpose.msra.mxu0 0.0
    %274 = vmatprep.subr.mxu0 0.0
    %275 = vmatpush1.xpose.msra.mxu0 0.0
    %276 = vmatprep.subr.mxu0 0.0
    %277 = vmatpush1.xpose.msra.mxu0 0.0
    %278 = vmatprep.subr.mxu0 0.0
    %279 = vmatpush1.xpose.msra.mxu0 0.0
    %280 = vmatprep.subr.mxu0 0.0
    %281 = vmatpush1.xpose.msra.mxu0 0.0
    %282 = vmatprep.subr.mxu0 0.0
    %283 = vmatpush1.xpose.msra.mxu0 0.0
    %284 = vmatprep.subr.mxu0 0.0
    %285 = vmatpush1.xpose.msra.mxu0 0.0
    %286 = vmatprep.subr.mxu0 0.0
    %287 = vmatpush1.xpose.msra.mxu0 0.0
    %288 = vmatprep.subr.mxu0 0.0
    %289 = vmatpush1.xpose.msra.mxu0 0.0
    %290 = vmatprep.subr.mxu0 0.0
    %291 = vmatpush1.xpose.msra.mxu0 0.0
    %292 = vmatprep.subr.mxu0 0.0
    %293 = vmatpush1.xpose.msra.mxu0 0.0
    %294 = vmatprep.subr.mxu0 0.0
    %295 = vmatpush1.xpose.msra.mxu0 0.0
    %296 = vmatprep.subr.mxu0 0.0
    %297 = vmatpush1.xpose.msra.mxu0 0.0
    %298 = vmatprep.subr.mxu0 0.0
    %299 = vmatpush1.xpose.msra.mxu0 0.0
    %300 = vmatprep.mubr.f32.mxu0 0.0
    %301 = vmatmul.mubr.f32.gmra.mrb[0].mxu0 %v234
    %v302 = vpop.f32.mrb[0].mxu0
    %v303 = vadd.f32 0.0, %v302
    %v304 = vpop.f32.mrb[0].mxu0
    %305 = vdwg.mxu0
    %v306 = vunpack.c.0.s8 %v36
    %v307 = vunpack.c.1.s8 %v36
    %v308 = vunpack.c.2.s8 %v36
    %v309 = vunpack.c.3.s8 %v36
    %v310 = vcvt.s32.f32 %v306
    %v311 = vcvt.s32.f32 %v307
    %v312 = vcvt.s32.f32 %v308
    %v313 = vcvt.s32.f32 %v309
    %vm314 = vcmp.gt.f32.partialorder %v310, 0.5
    %vm315 = vcmp.gt.f32.partialorder %v311, 0.5
    %vm316 = vcmp.gt.f32.partialorder %v312, 0.5
    %vm317 = vcmp.gt.f32.partialorder %v313, 0.5
    %v318 = vsel %vm314, 0.0, -1e+30
    %v319 = vsel %vm315, 0.0, -1e+30
    %v320 = vsel %vm316, 0.0, -1e+30
    %v321 = vsel %vm317, 0.0, -1e+30
    %323 = vset.pattern.permute.xlu0 0
    %324 = vperm.xlu0 %323, %v215
    %v325 = vpop.permute.xlu0 %324
    %328 = vset.pattern.permute.xlu0 0
    %329 = vperm.xlu0 %328, %v220
    %v330 = vpop.permute.xlu0 %329
    %333 = vset.pattern.permute.xlu0 0
    %334 = vperm.xlu0 %333, %v225
    %v335 = vpop.permute.xlu0 %334
    %338 = vset.pattern.permute.xlu0 0
    %339 = vperm.xlu0 %338, %v230
    %v340 = vpop.permute.xlu0 %339
    %v342 = vlaneseq
    %v343 = vshrl.u32 %v342, 7
    %v344 = vsub.s32 0, %v343
    %v345 = vrot.slane %v303, %v344
    %v346 = vadd.f32 %v325, %v345
    %v347 = vadd.f32 %v330, %v345
    %v348 = vadd.f32 %v335, %v345
    %v349 = vadd.f32 %v340, %v345
    %vm350 = vcmp.ge.f32.partialorder %v346, 0.0
    %vm351 = vcmp.ge.f32.partialorder %v347, 0.0
    %vm352 = vcmp.ge.f32.partialorder %v348, 0.0
    %vm353 = vcmp.ge.f32.partialorder %v349, 0.0
    %v354 = vmul.f32 %v346, 0.2
    %v355 = vmul.f32 %v347, 0.2
    %v356 = vmul.f32 %v348, 0.2
    %v357 = vmul.f32 %v349, 0.2
    %v358 = vsel %vm350, %v346, %v354
    %v359 = vsel %vm351, %v347, %v355
    %v360 = vsel %vm352, %v348, %v356
    %v361 = vsel %vm353, %v349, %v357
    %v362 = vadd.f32 %v358, %v318
    %v363 = vadd.f32 %v359, %v319
    %v364 = vadd.f32 %v360, %v320
    %v365 = vadd.f32 %v361, %v321
    %vm366 = vcmask 261120
    %v367 = vsel %vm366, %v362, -inf
    %368 = vmax.xlane.f32.xlu0 %v367
    %v369 = vpop.xlane.xlu0 %368
    %v370 = vsel %vm366, %v363, -inf
    %371 = vmax.xlane.f32.xlu0 %v370
    %v372 = vpop.xlane.xlu0 %371
    %v373 = vsel %vm366, %v364, -inf
    %374 = vmax.xlane.f32.xlu0 %v373
    %v375 = vpop.xlane.xlu0 %374
    %v376 = vsel %vm366, %v365, -inf
    %377 = vmax.xlane.f32.xlu0 %v376
    %v378 = vpop.xlane.xlu0 %377
    %v379 = vsub.f32 %v362, %v369
    %v380 = vsub.f32 %v363, %v372
    %v381 = vsub.f32 %v364, %v375
    %v382 = vsub.f32 %v365, %v378
    %v383 = vmul.f32 %v379, 1.442695
    %v384 = vpow.pop %v383
    %v385 = vmul.f32 %v380, 1.442695
    %v386 = vpow.pop %v385
    %v387 = vmul.f32 %v381, 1.442695
    %v388 = vpow.pop %v387
    %v389 = vmul.f32 %v382, 1.442695
    %v390 = vpow.pop %v389
    %v391 = vsel %vm366, %v384, 0.0
    %392 = vadd.xlane.f32.xlu0 %v391
    %v393 = vpop.xlane.xlu0 %392
    %v394 = vsel %vm366, %v386, 0.0
    %395 = vadd.xlane.f32.xlu0 %v394
    %v396 = vpop.xlane.xlu0 %395
    %v397 = vsel %vm366, %v388, 0.0
    %398 = vadd.xlane.f32.xlu0 %v397
    %v399 = vpop.xlane.xlu0 %398
    %v400 = vsel %vm366, %v390, 0.0
    %401 = vadd.xlane.f32.xlu0 %v400
    %v402 = vpop.xlane.xlu0 %401
    %v403 = vrcp.pop %v393
    %v404 = vrcp.pop %v396
    %v405 = vrcp.pop %v399
    %v406 = vrcp.pop %v402
    %v407 = vmul.f32 %v384, %v403
    %v408 = vmul.f32 %v386, %v404
    %v409 = vmul.f32 %v388, %v405
    %v410 = vmul.f32 %v390, %v406
    %v412 = vsel %vm366, %v407, 0
    %v415 = vsel %vm366, %v408, 0
    %v418 = vsel %vm366, %v409, 0
    %v421 = vsel %vm366, %v410, 0
    %423 = vmatprep.subr.mxu0 0.0
    %424 = vmatpush1.msra.mxu0 %v117
    %425 = vmatprep.subr.mxu0 0.0
    %426 = vmatpush1.msra.mxu0 %v122
    %427 = vmatprep.subr.mxu0 0.0
    %428 = vmatpush1.msra.mxu0 %v127
    %429 = vmatprep.subr.mxu0 0.0
    %430 = vmatpush1.msra.mxu0 %v132
    %431 = vmatprep.subr.mxu0 0.0
    %432 = vmatpush1.msra.mxu0 0.0
    %433 = vmatprep.subr.mxu0 0.0
    %434 = vmatpush1.msra.mxu0 0.0
    %435 = vmatprep.subr.mxu0 0.0
    %436 = vmatpush1.msra.mxu0 0.0
    %437 = vmatprep.subr.mxu0 0.0
    %438 = vmatpush1.msra.mxu0 0.0
    %439 = vmatprep.subr.mxu0 0.0
    %440 = vmatpush1.msra.mxu0 0.0
    %441 = vmatprep.subr.mxu0 0.0
    %442 = vmatpush1.msra.mxu0 0.0
    %443 = vmatprep.subr.mxu0 0.0
    %444 = vmatpush1.msra.mxu0 0.0
    %445 = vmatprep.subr.mxu0 0.0
    %446 = vmatpush1.msra.mxu0 0.0
    %447 = vmatprep.subr.mxu0 0.0
    %448 = vmatpush1.msra.mxu0 0.0
    %449 = vmatprep.subr.mxu0 0.0
    %450 = vmatpush1.msra.mxu0 0.0
    %451 = vmatprep.subr.mxu0 0.0
    %452 = vmatpush1.msra.mxu0 0.0
    %453 = vmatprep.subr.mxu0 0.0
    %454 = vmatpush1.msra.mxu0 0.0
    %455 = vmatprep.subr.mxu0 0.0
    %456 = vmatpush1.msra.mxu0 0.0
    %457 = vmatprep.subr.mxu0 0.0
    %458 = vmatpush1.msra.mxu0 0.0
    %459 = vmatprep.subr.mxu0 0.0
    %460 = vmatpush1.msra.mxu0 0.0
    %461 = vmatprep.subr.mxu0 0.0
    %462 = vmatpush1.msra.mxu0 0.0
    %463 = vmatprep.subr.mxu0 0.0
    %464 = vmatpush1.msra.mxu0 0.0
    %465 = vmatprep.subr.mxu0 0.0
    %466 = vmatpush1.msra.mxu0 0.0
    %467 = vmatprep.subr.mxu0 0.0
    %468 = vmatpush1.msra.mxu0 0.0
    %469 = vmatprep.subr.mxu0 0.0
    %470 = vmatpush1.msra.mxu0 0.0
    %471 = vmatprep.subr.mxu0 0.0
    %472 = vmatpush1.msra.mxu0 0.0
    %473 = vmatprep.subr.mxu0 0.0
    %474 = vmatpush1.msra.mxu0 0.0
    %475 = vmatprep.subr.mxu0 0.0
    %476 = vmatpush1.msra.mxu0 0.0
    %477 = vmatprep.subr.mxu0 0.0
    %478 = vmatpush1.msra.mxu0 0.0
    %479 = vmatprep.subr.mxu0 0.0
    %480 = vmatpush1.msra.mxu0 0.0
    %481 = vmatprep.subr.mxu0 0.0
    %482 = vmatpush1.msra.mxu0 0.0
    %483 = vmatprep.subr.mxu0 0.0
    %484 = vmatpush1.msra.mxu0 0.0
    %485 = vmatprep.subr.mxu0 0.0
    %486 = vmatpush1.msra.mxu0 0.0
    %487 = vmatprep.mubr.f32.mxu0 0.0
    %488 = vmatmul.mubr.f32.gmra.mrb[0].mxu0 %v412
    %v489 = vpop.f32.mrb[0].mxu0
    %v490 = vadd.f32 0.0, %v489
    %v491 = vpop.f32.mrb[0].mxu0
    %492 = vmatprep.mubr.f32.mxu0 0.0
    %493 = vmatmul.mubr.f32.gmra.mrb[0].mxu0 %v415
    %v494 = vpop.f32.mrb[0].mxu0
    %v495 = vadd.f32 0.0, %v494
    %v496 = vpop.f32.mrb[0].mxu0
    %497 = vmatprep.mubr.f32.mxu0 0.0
    %498 = vmatmul.mubr.f32.gmra.mrb[0].mxu0 %v418
    %v499 = vpop.f32.mrb[0].mxu0
    %v500 = vadd.f32 0.0, %v499
    %v501 = vpop.f32.mrb[0].mxu0
    %502 = vmatprep.mubr.f32.mxu0 0.0
    %503 = vmatmul.mubr.f32.gmra.mrb[0].mxu0 %v421
    %v504 = vpop.f32.mrb[0].mxu0
    %v505 = vadd.f32 0.0, %v504
    %v506 = vpop.f32.mrb[0].mxu0
    %507 = vdwg.mxu0
    %508 = vset.pattern.permute.xlu0 1
    %509 = vperm.xlu0 %508, %v215
    %v510 = vpop.permute.xlu0 %509
    %512 = vset.pattern.permute.xlu0 1
    %513 = vperm.xlu0 %512, %v220
    %v514 = vpop.permute.xlu0 %513
    %516 = vset.pattern.permute.xlu0 1
    %517 = vperm.xlu0 %516, %v225
    %v518 = vpop.permute.xlu0 %517
    %520 = vset.pattern.permute.xlu0 1
    %521 = vperm.xlu0 %520, %v230
    %v522 = vpop.permute.xlu0 %521
    %v524 = vlaneseq
    %v525 = vshrl.u32 %v524, 7
    %v526 = vsub.s32 1, %v525
    %v527 = vrot.slane %v303, %v526
    %v528 = vadd.f32 %v510, %v527
    %v529 = vadd.f32 %v514, %v527
    %v530 = vadd.f32 %v518, %v527
    %v531 = vadd.f32 %v522, %v527
    %vm532 = vcmp.ge.f32.partialorder %v528, 0.0
    %vm533 = vcmp.ge.f32.partialorder %v529, 0.0
    %vm534 = vcmp.ge.f32.partialorder %v530, 0.0
    %vm535 = vcmp.ge.f32.partialorder %v531, 0.0
    %v536 = vmul.f32 %v528, 0.2
    %v537 = vmul.f32 %v529, 0.2
    %v538 = vmul.f32 %v530, 0.2
    %v539 = vmul.f32 %v531, 0.2
    %v540 = vsel %vm532, %v528, %v536
    %v541 = vsel %vm533, %v529, %v537
    %v542 = vsel %vm534, %v530, %v538
    %v543 = vsel %vm535, %v531, %v539
    %v544 = vadd.f32 %v540, %v318
    %v545 = vadd.f32 %v541, %v319
    %v546 = vadd.f32 %v542, %v320
    %v547 = vadd.f32 %v543, %v321
    %v548 = vsel %vm366, %v544, -inf
    %549 = vmax.xlane.f32.xlu0 %v548
    %v550 = vpop.xlane.xlu0 %549
    %v551 = vsel %vm366, %v545, -inf
    %552 = vmax.xlane.f32.xlu0 %v551
    %v553 = vpop.xlane.xlu0 %552
    %v554 = vsel %vm366, %v546, -inf
    %555 = vmax.xlane.f32.xlu0 %v554
    %v556 = vpop.xlane.xlu0 %555
    %v557 = vsel %vm366, %v547, -inf
    %558 = vmax.xlane.f32.xlu0 %v557
    %v559 = vpop.xlane.xlu0 %558
    %v560 = vsub.f32 %v544, %v550
    %v561 = vsub.f32 %v545, %v553
    %v562 = vsub.f32 %v546, %v556
    %v563 = vsub.f32 %v547, %v559
    %v564 = vmul.f32 %v560, 1.442695
    %v565 = vpow.pop %v564
    %v566 = vmul.f32 %v561, 1.442695
    %v567 = vpow.pop %v566
    %v568 = vmul.f32 %v562, 1.442695
    %v569 = vpow.pop %v568
    %v570 = vmul.f32 %v563, 1.442695
    %v571 = vpow.pop %v570
    %v572 = vsel %vm366, %v565, 0.0
    %573 = vadd.xlane.f32.xlu0 %v572
    %v574 = vpop.xlane.xlu0 %573
    %v575 = vsel %vm366, %v567, 0.0
    %576 = vadd.xlane.f32.xlu0 %v575
    %v577 = vpop.xlane.xlu0 %576
    %v578 = vsel %vm366, %v569, 0.0
    %579 = vadd.xlane.f32.xlu0 %v578
    %v580 = vpop.xlane.xlu0 %579
    %v581 = vsel %vm366, %v571, 0.0
    %582 = vadd.xlane.f32.xlu0 %v581
    %v583 = vpop.xlane.xlu0 %582
    %v584 = vrcp.pop %v574
    %v585 = vrcp.pop %v577
    %v586 = vrcp.pop %v580
    %v587 = vrcp.pop %v583
    %v588 = vmul.f32 %v565, %v584
    %v589 = vmul.f32 %v567, %v585
    %v590 = vmul.f32 %v569, %v586
    %v591 = vmul.f32 %v571, %v587
    %592 = vrot.lane.b32.xlu0 %v117, 120
    %v593 = vpop.permute.xlu0 %592
    %594 = vrot.lane.b32.xlu0 %v122, 120
    %v595 = vpop.permute.xlu0 %594
    %596 = vrot.lane.b32.xlu0 %v127, 120
    %v597 = vpop.permute.xlu0 %596
    %598 = vrot.lane.b32.xlu0 %v132, 120
    %v599 = vpop.permute.xlu0 %598
    %v605 = vsel %vm366, %v588, 0
    %v608 = vsel %vm366, %v589, 0
    %v611 = vsel %vm366, %v590, 0
    %v614 = vsel %vm366, %v591, 0
    %616 = vmatprep.subr.mxu0 0.0
    %617 = vmatpush1.msra.mxu0 %v593
    %618 = vmatprep.subr.mxu0 0.0
    %619 = vmatpush1.msra.mxu0 %v595
    %620 = vmatprep.subr.mxu0 0.0
    %621 = vmatpush1.msra.mxu0 %v597
    %622 = vmatprep.subr.mxu0 0.0
    %623 = vmatpush1.msra.mxu0 %v599
    %624 = vmatprep.subr.mxu0 0.0
    %625 = vmatpush1.msra.mxu0 0.0
    %626 = vmatprep.subr.mxu0 0.0
    %627 = vmatpush1.msra.mxu0 0.0
    %628 = vmatprep.subr.mxu0 0.0
    %629 = vmatpush1.msra.mxu0 0.0
    %630 = vmatprep.subr.mxu0 0.0
    %631 = vmatpush1.msra.mxu0 0.0
    %632 = vmatprep.subr.mxu0 0.0
    %633 = vmatpush1.msra.mxu0 0.0
    %634 = vmatprep.subr.mxu0 0.0
    %635 = vmatpush1.msra.mxu0 0.0
    %636 = vmatprep.subr.mxu0 0.0
    %637 = vmatpush1.msra.mxu0 0.0
    %638 = vmatprep.subr.mxu0 0.0
    %639 = vmatpush1.msra.mxu0 0.0
    %640 = vmatprep.subr.mxu0 0.0
    %641 = vmatpush1.msra.mxu0 0.0
    %642 = vmatprep.subr.mxu0 0.0
    %643 = vmatpush1.msra.mxu0 0.0
    %644 = vmatprep.subr.mxu0 0.0
    %645 = vmatpush1.msra.mxu0 0.0
    %646 = vmatprep.subr.mxu0 0.0
    %647 = vmatpush1.msra.mxu0 0.0
    %648 = vmatprep.subr.mxu0 0.0
    %649 = vmatpush1.msra.mxu0 0.0
    %650 = vmatprep.subr.mxu0 0.0
    %651 = vmatpush1.msra.mxu0 0.0
    %652 = vmatprep.subr.mxu0 0.0
    %653 = vmatpush1.msra.mxu0 0.0
    %654 = vmatprep.subr.mxu0 0.0
    %655 = vmatpush1.msra.mxu0 0.0
    %656 = vmatprep.subr.mxu0 0.0
    %657 = vmatpush1.msra.mxu0 0.0
    %658 = vmatprep.subr.mxu0 0.0
    %659 = vmatpush1.msra.mxu0 0.0
    %660 = vmatprep.subr.mxu0 0.0
    %661 = vmatpush1.msra.mxu0 0.0
    %662 = vmatprep.subr.mxu0 0.0
    %663 = vmatpush1.msra.mxu0 0.0
    %664 = vmatprep.subr.mxu0 0.0
    %665 = vmatpush1.msra.mxu0 0.0
    %666 = vmatprep.subr.mxu0 0.0
    %667 = vmatpush1.msra.mxu0 0.0
    %668 = vmatprep.subr.mxu0 0.0
    %669 = vmatpush1.msra.mxu0 0.0
    %670 = vmatprep.subr.mxu0 0.0
    %671 = vmatpush1.msra.mxu0 0.0
    %672 = vmatprep.subr.mxu0 0.0
    %673 = vmatpush1.msra.mxu0 0.0
    %674 = vmatprep.subr.mxu0 0.0
    %675 = vmatpush1.msra.mxu0 0.0
    %676 = vmatprep.subr.mxu0 0.0
    %677 = vmatpush1.msra.mxu0 0.0
    %678 = vmatprep.subr.mxu0 0.0
    %679 = vmatpush1.msra.mxu0 0.0
    %680 = vmatprep.mubr.f32.mxu0 0.0
    %681 = vmatmul.mubr.f32.gmra.mrb[0].mxu0 %v605
    %v682 = vpop.f32.mrb[0].mxu0
    %v683 = vadd.f32 0.0, %v682
    %v684 = vpop.f32.mrb[0].mxu0
    %685 = vmatprep.mubr.f32.mxu0 0.0
    %686 = vmatmul.mubr.f32.gmra.mrb[0].mxu0 %v608
    %v687 = vpop.f32.mrb[0].mxu0
    %v688 = vadd.f32 0.0, %v687
    %v689 = vpop.f32.mrb[0].mxu0
    %690 = vmatprep.mubr.f32.mxu0 0.0
    %691 = vmatmul.mubr.f32.gmra.mrb[0].mxu0 %v611
    %v692 = vpop.f32.mrb[0].mxu0
    %v693 = vadd.f32 0.0, %v692
    %v694 = vpop.f32.mrb[0].mxu0
    %695 = vmatprep.mubr.f32.mxu0 0.0
    %696 = vmatmul.mubr.f32.gmra.mrb[0].mxu0 %v614
    %v697 = vpop.f32.mrb[0].mxu0
    %v698 = vadd.f32 0.0, %v697
    %v699 = vpop.f32.mrb[0].mxu0
    %700 = vdwg.mxu0
    %701 = vset.pattern.permute.xlu0 2
    %702 = vperm.xlu0 %701, %v215
    %v703 = vpop.permute.xlu0 %702
    %705 = vset.pattern.permute.xlu0 2
    %706 = vperm.xlu0 %705, %v220
    %v707 = vpop.permute.xlu0 %706
    %709 = vset.pattern.permute.xlu0 2
    %710 = vperm.xlu0 %709, %v225
    %v711 = vpop.permute.xlu0 %710
    %713 = vset.pattern.permute.xlu0 2
    %714 = vperm.xlu0 %713, %v230
    %v715 = vpop.permute.xlu0 %714
    %v717 = vlaneseq
    %v718 = vshrl.u32 %v717, 7
    %v719 = vsub.s32 2, %v718
    %v720 = vrot.slane %v303, %v719
    %v721 = vadd.f32 %v703, %v720
    %v722 = vadd.f32 %v707, %v720
    %v723 = vadd.f32 %v711, %v720
    %v724 = vadd.f32 %v715, %v720
    %vm725 = vcmp.ge.f32.partialorder %v721, 0.0
    %vm726 = vcmp.ge.f32.partialorder %v722, 0.0
    %vm727 = vcmp.ge.f32.partialorder %v723, 0.0
    %vm728 = vcmp.ge.f32.partialorder %v724, 0.0
    %v729 = vmul.f32 %v721, 0.2
    %v730 = vmul.f32 %v722, 0.2
    %v731 = vmul.f32 %v723, 0.2
    %v732 = vmul.f32 %v724, 0.2
    %v733 = vsel %vm725, %v721, %v729
    %v734 = vsel %vm726, %v722, %v730
    %v735 = vsel %vm727, %v723, %v731
    %v736 = vsel %vm728, %v724, %v732
    %v737 = vadd.f32 %v733, %v318
    %v738 = vadd.f32 %v734, %v319
    %v739 = vadd.f32 %v735, %v320
    %v740 = vadd.f32 %v736, %v321
    %v741 = vsel %vm366, %v737, -inf
    %742 = vmax.xlane.f32.xlu0 %v741
    %v743 = vpop.xlane.xlu0 %742
    %v744 = vsel %vm366, %v738, -inf
    %745 = vmax.xlane.f32.xlu0 %v744
    %v746 = vpop.xlane.xlu0 %745
    %v747 = vsel %vm366, %v739, -inf
    %748 = vmax.xlane.f32.xlu0 %v747
    %v749 = vpop.xlane.xlu0 %748
    %v750 = vsel %vm366, %v740, -inf
    %751 = vmax.xlane.f32.xlu0 %v750
    %v752 = vpop.xlane.xlu0 %751
    %v753 = vsub.f32 %v737, %v743
    %v754 = vsub.f32 %v738, %v746
    %v755 = vsub.f32 %v739, %v749
    %v756 = vsub.f32 %v740, %v752
    %v757 = vmul.f32 %v753, 1.442695
    %v758 = vpow.pop %v757
    %v759 = vmul.f32 %v754, 1.442695
    %v760 = vpow.pop %v759
    %v761 = vmul.f32 %v755, 1.442695
    %v762 = vpow.pop %v761
    %v763 = vmul.f32 %v756, 1.442695
    %v764 = vpow.pop %v763
    %v765 = vsel %vm366, %v758, 0.0
    %766 = vadd.xlane.f32.xlu0 %v765
    %v767 = vpop.xlane.xlu0 %766
    %v768 = vsel %vm366, %v760, 0.0
    %769 = vadd.xlane.f32.xlu0 %v768
    %v770 = vpop.xlane.xlu0 %769
    %v771 = vsel %vm366, %v762, 0.0
    %772 = vadd.xlane.f32.xlu0 %v771
    %v773 = vpop.xlane.xlu0 %772
    %v774 = vsel %vm366, %v764, 0.0
    %775 = vadd.xlane.f32.xlu0 %v774
    %v776 = vpop.xlane.xlu0 %775
    %v777 = vrcp.pop %v767
    %v778 = vrcp.pop %v770
    %v779 = vrcp.pop %v773
    %v780 = vrcp.pop %v776
    %v781 = vmul.f32 %v758, %v777
    %v782 = vmul.f32 %v760, %v778
    %v783 = vmul.f32 %v762, %v779
    %v784 = vmul.f32 %v764, %v780
    %785 = vrot.lane.b32.xlu0 %v117, 112
    %v786 = vpop.permute.xlu0 %785
    %787 = vrot.lane.b32.xlu0 %v122, 112
    %v788 = vpop.permute.xlu0 %787
    %789 = vrot.lane.b32.xlu0 %v127, 112
    %v790 = vpop.permute.xlu0 %789
    %791 = vrot.lane.b32.xlu0 %v132, 112
    %v792 = vpop.permute.xlu0 %791
    %v798 = vsel %vm366, %v781, 0
    %v801 = vsel %vm366, %v782, 0
    %v804 = vsel %vm366, %v783, 0
    %v807 = vsel %vm366, %v784, 0
    %809 = vmatprep.subr.mxu0 0.0
    %810 = vmatpush1.msra.mxu0 %v786
    %811 = vmatprep.subr.mxu0 0.0
    %812 = vmatpush1.msra.mxu0 %v788
    %813 = vmatprep.subr.mxu0 0.0
    %814 = vmatpush1.msra.mxu0 %v790
    %815 = vmatprep.subr.mxu0 0.0
    %816 = vmatpush1.msra.mxu0 %v792
    %817 = vmatprep.subr.mxu0 0.0
    %818 = vmatpush1.msra.mxu0 0.0
    %819 = vmatprep.subr.mxu0 0.0
    %820 = vmatpush1.msra.mxu0 0.0
    %821 = vmatprep.subr.mxu0 0.0
    %822 = vmatpush1.msra.mxu0 0.0
    %823 = vmatprep.subr.mxu0 0.0
    %824 = vmatpush1.msra.mxu0 0.0
    %825 = vmatprep.subr.mxu0 0.0
    %826 = vmatpush1.msra.mxu0 0.0
    %827 = vmatprep.subr.mxu0 0.0
    %828 = vmatpush1.msra.mxu0 0.0
    %829 = vmatprep.subr.mxu0 0.0
    %830 = vmatpush1.msra.mxu0 0.0
    %831 = vmatprep.subr.mxu0 0.0
    %832 = vmatpush1.msra.mxu0 0.0
    %833 = vmatprep.subr.mxu0 0.0
    %834 = vmatpush1.msra.mxu0 0.0
    %835 = vmatprep.subr.mxu0 0.0
    %836 = vmatpush1.msra.mxu0 0.0
    %837 = vmatprep.subr.mxu0 0.0
    %838 = vmatpush1.msra.mxu0 0.0
    %839 = vmatprep.subr.mxu0 0.0
    %840 = vmatpush1.msra.mxu0 0.0
    %841 = vmatprep.subr.mxu0 0.0
    %842 = vmatpush1.msra.mxu0 0.0
    %843 = vmatprep.subr.mxu0 0.0
    %844 = vmatpush1.msra.mxu0 0.0
    %845 = vmatprep.subr.mxu0 0.0
    %846 = vmatpush1.msra.mxu0 0.0
    %847 = vmatprep.subr.mxu0 0.0
    %848 = vmatpush1.msra.mxu0 0.0
    %849 = vmatprep.subr.mxu0 0.0
    %850 = vmatpush1.msra.mxu0 0.0
    %851 = vmatprep.subr.mxu0 0.0
    %852 = vmatpush1.msra.mxu0 0.0
    %853 = vmatprep.subr.mxu0 0.0
    %854 = vmatpush1.msra.mxu0 0.0
    %855 = vmatprep.subr.mxu0 0.0
    %856 = vmatpush1.msra.mxu0 0.0
    %857 = vmatprep.subr.mxu0 0.0
    %858 = vmatpush1.msra.mxu0 0.0
    %859 = vmatprep.subr.mxu0 0.0
    %860 = vmatpush1.msra.mxu0 0.0
    %861 = vmatprep.subr.mxu0 0.0
    %862 = vmatpush1.msra.mxu0 0.0
    %863 = vmatprep.subr.mxu0 0.0
    %864 = vmatpush1.msra.mxu0 0.0
    %865 = vmatprep.subr.mxu0 0.0
    %866 = vmatpush1.msra.mxu0 0.0
    %867 = vmatprep.subr.mxu0 0.0
    %868 = vmatpush1.msra.mxu0 0.0
    %869 = vmatprep.subr.mxu0 0.0
    %870 = vmatpush1.msra.mxu0 0.0
    %871 = vmatprep.subr.mxu0 0.0
    %872 = vmatpush1.msra.mxu0 0.0
    %873 = vmatprep.mubr.f32.mxu0 0.0
    %874 = vmatmul.mubr.f32.gmra.mrb[0].mxu0 %v798
    %v875 = vpop.f32.mrb[0].mxu0
    %v876 = vadd.f32 0.0, %v875
    %v877 = vpop.f32.mrb[0].mxu0
    %878 = vmatprep.mubr.f32.mxu0 0.0
    %879 = vmatmul.mubr.f32.gmra.mrb[0].mxu0 %v801
    %v880 = vpop.f32.mrb[0].mxu0
    %v881 = vadd.f32 0.0, %v880
    %v882 = vpop.f32.mrb[0].mxu0
    %883 = vmatprep.mubr.f32.mxu0 0.0
    %884 = vmatmul.mubr.f32.gmra.mrb[0].mxu0 %v804
    %v885 = vpop.f32.mrb[0].mxu0
    %v886 = vadd.f32 0.0, %v885
    %v887 = vpop.f32.mrb[0].mxu0
    %888 = vmatprep.mubr.f32.mxu0 0.0
    %889 = vmatmul.mubr.f32.gmra.mrb[0].mxu0 %v807
    %v890 = vpop.f32.mrb[0].mxu0
    %v891 = vadd.f32 0.0, %v890
    %v892 = vpop.f32.mrb[0].mxu0
    %893 = vdwg.mxu0
    %894 = vset.pattern.permute.xlu0 3
    %895 = vperm.xlu0 %894, %v215
    %v896 = vpop.permute.xlu0 %895
    %898 = vset.pattern.permute.xlu0 3
    %899 = vperm.xlu0 %898, %v220
    %v900 = vpop.permute.xlu0 %899
    %902 = vset.pattern.permute.xlu0 3
    %903 = vperm.xlu0 %902, %v225
    %v904 = vpop.permute.xlu0 %903
    %906 = vset.pattern.permute.xlu0 3
    %907 = vperm.xlu0 %906, %v230
    %v908 = vpop.permute.xlu0 %907
    %v910 = vlaneseq
    %v911 = vshrl.u32 %v910, 7
    %v912 = vsub.s32 3, %v911
    %v913 = vrot.slane %v303, %v912
    %v914 = vadd.f32 %v896, %v913
    %v915 = vadd.f32 %v900, %v913
    %v916 = vadd.f32 %v904, %v913
    %v917 = vadd.f32 %v908, %v913
    %vm918 = vcmp.ge.f32.partialorder %v914, 0.0
    %vm919 = vcmp.ge.f32.partialorder %v915, 0.0
    %vm920 = vcmp.ge.f32.partialorder %v916, 0.0
    %vm921 = vcmp.ge.f32.partialorder %v917, 0.0
    %v922 = vmul.f32 %v914, 0.2
    %v923 = vmul.f32 %v915, 0.2
    %v924 = vmul.f32 %v916, 0.2
    %v925 = vmul.f32 %v917, 0.2
    %v926 = vsel %vm918, %v914, %v922
    %v927 = vsel %vm919, %v915, %v923
    %v928 = vsel %vm920, %v916, %v924
    %v929 = vsel %vm921, %v917, %v925
    %v930 = vadd.f32 %v926, %v318
    %v931 = vadd.f32 %v927, %v319
    %v932 = vadd.f32 %v928, %v320
    %v933 = vadd.f32 %v929, %v321
    %v934 = vsel %vm366, %v930, -inf
    %935 = vmax.xlane.f32.xlu0 %v934
    %v936 = vpop.xlane.xlu0 %935
    %v937 = vsel %vm366, %v931, -inf
    %938 = vmax.xlane.f32.xlu0 %v937
    %v939 = vpop.xlane.xlu0 %938
    %v940 = vsel %vm366, %v932, -inf
    %941 = vmax.xlane.f32.xlu0 %v940
    %v942 = vpop.xlane.xlu0 %941
    %v943 = vsel %vm366, %v933, -inf
    %944 = vmax.xlane.f32.xlu0 %v943
    %v945 = vpop.xlane.xlu0 %944
    %v946 = vsub.f32 %v930, %v936
    %v947 = vsub.f32 %v931, %v939
    %v948 = vsub.f32 %v932, %v942
    %v949 = vsub.f32 %v933, %v945
    %v950 = vmul.f32 %v946, 1.442695
    %v951 = vpow.pop %v950
    %v952 = vmul.f32 %v947, 1.442695
    %v953 = vpow.pop %v952
    %v954 = vmul.f32 %v948, 1.442695
    %v955 = vpow.pop %v954
    %v956 = vmul.f32 %v949, 1.442695
    %v957 = vpow.pop %v956
    %v958 = vsel %vm366, %v951, 0.0
    %959 = vadd.xlane.f32.xlu0 %v958
    %v960 = vpop.xlane.xlu0 %959
    %v961 = vsel %vm366, %v953, 0.0
    %962 = vadd.xlane.f32.xlu0 %v961
    %v963 = vpop.xlane.xlu0 %962
    %v964 = vsel %vm366, %v955, 0.0
    %965 = vadd.xlane.f32.xlu0 %v964
    %v966 = vpop.xlane.xlu0 %965
    %v967 = vsel %vm366, %v957, 0.0
    %968 = vadd.xlane.f32.xlu0 %v967
    %v969 = vpop.xlane.xlu0 %968
    %v970 = vrcp.pop %v960
    %v971 = vrcp.pop %v963
    %v972 = vrcp.pop %v966
    %v973 = vrcp.pop %v969
    %v974 = vmul.f32 %v951, %v970
    %v975 = vmul.f32 %v953, %v971
    %v976 = vmul.f32 %v955, %v972
    %v977 = vmul.f32 %v957, %v973
    %978 = vrot.lane.b32.xlu0 %v117, 104
    %v979 = vpop.permute.xlu0 %978
    %980 = vrot.lane.b32.xlu0 %v122, 104
    %v981 = vpop.permute.xlu0 %980
    %982 = vrot.lane.b32.xlu0 %v127, 104
    %v983 = vpop.permute.xlu0 %982
    %984 = vrot.lane.b32.xlu0 %v132, 104
    %v985 = vpop.permute.xlu0 %984
    %v991 = vsel %vm366, %v974, 0
    %v994 = vsel %vm366, %v975, 0
    %v997 = vsel %vm366, %v976, 0
    %v1000 = vsel %vm366, %v977, 0
    %1002 = vmatprep.subr.mxu0 0.0
    %1003 = vmatpush1.msra.mxu0 %v979
    %1004 = vmatprep.subr.mxu0 0.0
    %1005 = vmatpush1.msra.mxu0 %v981
    %1006 = vmatprep.subr.mxu0 0.0
    %1007 = vmatpush1.msra.mxu0 %v983
    %1008 = vmatprep.subr.mxu0 0.0
    %1009 = vmatpush1.msra.mxu0 %v985
    %1010 = vmatprep.subr.mxu0 0.0
    %1011 = vmatpush1.msra.mxu0 0.0
    %1012 = vmatprep.subr.mxu0 0.0
    %1013 = vmatpush1.msra.mxu0 0.0
    %1014 = vmatprep.subr.mxu0 0.0
    %1015 = vmatpush1.msra.mxu0 0.0
    %1016 = vmatprep.subr.mxu0 0.0
    %1017 = vmatpush1.msra.mxu0 0.0
    %1018 = vmatprep.subr.mxu0 0.0
    %1019 = vmatpush1.msra.mxu0 0.0
    %1020 = vmatprep.subr.mxu0 0.0
    %1021 = vmatpush1.msra.mxu0 0.0
    %1022 = vmatprep.subr.mxu0 0.0
    %1023 = vmatpush1.msra.mxu0 0.0
    %1024 = vmatprep.subr.mxu0 0.0
    %1025 = vmatpush1.msra.mxu0 0.0
    %1026 = vmatprep.subr.mxu0 0.0
    %1027 = vmatpush1.msra.mxu0 0.0
    %1028 = vmatprep.subr.mxu0 0.0
    %1029 = vmatpush1.msra.mxu0 0.0
    %1030 = vmatprep.subr.mxu0 0.0
    %1031 = vmatpush1.msra.mxu0 0.0
    %1032 = vmatprep.subr.mxu0 0.0
    %1033 = vmatpush1.msra.mxu0 0.0
    %1034 = vmatprep.subr.mxu0 0.0
    %1035 = vmatpush1.msra.mxu0 0.0
    %1036 = vmatprep.subr.mxu0 0.0
    %1037 = vmatpush1.msra.mxu0 0.0
    %1038 = vmatprep.subr.mxu0 0.0
    %1039 = vmatpush1.msra.mxu0 0.0
    %1040 = vmatprep.subr.mxu0 0.0
    %1041 = vmatpush1.msra.mxu0 0.0
    %1042 = vmatprep.subr.mxu0 0.0
    %1043 = vmatpush1.msra.mxu0 0.0
    %1044 = vmatprep.subr.mxu0 0.0
    %1045 = vmatpush1.msra.mxu0 0.0
    %1046 = vmatprep.subr.mxu0 0.0
    %1047 = vmatpush1.msra.mxu0 0.0
    %1048 = vmatprep.subr.mxu0 0.0
    %1049 = vmatpush1.msra.mxu0 0.0
    %1050 = vmatprep.subr.mxu0 0.0
    %1051 = vmatpush1.msra.mxu0 0.0
    %1052 = vmatprep.subr.mxu0 0.0
    %1053 = vmatpush1.msra.mxu0 0.0
    %1054 = vmatprep.subr.mxu0 0.0
    %1055 = vmatpush1.msra.mxu0 0.0
    %1056 = vmatprep.subr.mxu0 0.0
    %1057 = vmatpush1.msra.mxu0 0.0
    %1058 = vmatprep.subr.mxu0 0.0
    %1059 = vmatpush1.msra.mxu0 0.0
    %1060 = vmatprep.subr.mxu0 0.0
    %1061 = vmatpush1.msra.mxu0 0.0
    %1062 = vmatprep.subr.mxu0 0.0
    %1063 = vmatpush1.msra.mxu0 0.0
    %1064 = vmatprep.subr.mxu0 0.0
    %1065 = vmatpush1.msra.mxu0 0.0
    %1066 = vmatprep.mubr.f32.mxu0 0.0
    %1067 = vmatmul.mubr.f32.gmra.mrb[0].mxu0 %v991
    %v1068 = vpop.f32.mrb[0].mxu0
    %v1069 = vadd.f32 0.0, %v1068
    %v1070 = vpop.f32.mrb[0].mxu0
    %1071 = vmatprep.mubr.f32.mxu0 0.0
    %1072 = vmatmul.mubr.f32.gmra.mrb[0].mxu0 %v994
    %v1073 = vpop.f32.mrb[0].mxu0
    %v1074 = vadd.f32 0.0, %v1073
    %v1075 = vpop.f32.mrb[0].mxu0
    %1076 = vmatprep.mubr.f32.mxu0 0.0
    %1077 = vmatmul.mubr.f32.gmra.mrb[0].mxu0 %v997
    %v1078 = vpop.f32.mrb[0].mxu0
    %v1079 = vadd.f32 0.0, %v1078
    %v1080 = vpop.f32.mrb[0].mxu0
    %1081 = vmatprep.mubr.f32.mxu0 0.0
    %1082 = vmatmul.mubr.f32.gmra.mrb[0].mxu0 %v1000
    %v1083 = vpop.f32.mrb[0].mxu0
    %v1084 = vadd.f32 0.0, %v1083
    %v1085 = vpop.f32.mrb[0].mxu0
    %1086 = vdwg.mxu0
    %1087 = vset.pattern.permute.xlu0 4
    %1088 = vperm.xlu0 %1087, %v215
    %v1089 = vpop.permute.xlu0 %1088
    %1091 = vset.pattern.permute.xlu0 4
    %1092 = vperm.xlu0 %1091, %v220
    %v1093 = vpop.permute.xlu0 %1092
    %1095 = vset.pattern.permute.xlu0 4
    %1096 = vperm.xlu0 %1095, %v225
    %v1097 = vpop.permute.xlu0 %1096
    %1099 = vset.pattern.permute.xlu0 4
    %1100 = vperm.xlu0 %1099, %v230
    %v1101 = vpop.permute.xlu0 %1100
    %v1103 = vlaneseq
    %v1104 = vshrl.u32 %v1103, 7
    %v1105 = vsub.s32 4, %v1104
    %v1106 = vrot.slane %v303, %v1105
    %v1107 = vadd.f32 %v1089, %v1106
    %v1108 = vadd.f32 %v1093, %v1106
    %v1109 = vadd.f32 %v1097, %v1106
    %v1110 = vadd.f32 %v1101, %v1106
    %vm1111 = vcmp.ge.f32.partialorder %v1107, 0.0
    %vm1112 = vcmp.ge.f32.partialorder %v1108, 0.0
    %vm1113 = vcmp.ge.f32.partialorder %v1109, 0.0
    %vm1114 = vcmp.ge.f32.partialorder %v1110, 0.0
    %v1115 = vmul.f32 %v1107, 0.2
    %v1116 = vmul.f32 %v1108, 0.2
    %v1117 = vmul.f32 %v1109, 0.2
    %v1118 = vmul.f32 %v1110, 0.2
    %v1119 = vsel %vm1111, %v1107, %v1115
    %v1120 = vsel %vm1112, %v1108, %v1116
    %v1121 = vsel %vm1113, %v1109, %v1117
    %v1122 = vsel %vm1114, %v1110, %v1118
    %v1123 = vadd.f32 %v1119, %v318
    %v1124 = vadd.f32 %v1120, %v319
    %v1125 = vadd.f32 %v1121, %v320
    %v1126 = vadd.f32 %v1122, %v321
    %v1127 = vsel %vm366, %v1123, -inf
    %1128 = vmax.xlane.f32.xlu0 %v1127
    %v1129 = vpop.xlane.xlu0 %1128
    %v1130 = vsel %vm366, %v1124, -inf
    %1131 = vmax.xlane.f32.xlu0 %v1130
    %v1132 = vpop.xlane.xlu0 %1131
    %v1133 = vsel %vm366, %v1125, -inf
    %1134 = vmax.xlane.f32.xlu0 %v1133
    %v1135 = vpop.xlane.xlu0 %1134
    %v1136 = vsel %vm366, %v1126, -inf
    %1137 = vmax.xlane.f32.xlu0 %v1136
    %v1138 = vpop.xlane.xlu0 %1137
    %v1139 = vsub.f32 %v1123, %v1129
    %v1140 = vsub.f32 %v1124, %v1132
    %v1141 = vsub.f32 %v1125, %v1135
    %v1142 = vsub.f32 %v1126, %v1138
    %v1143 = vmul.f32 %v1139, 1.442695
    %v1144 = vpow.pop %v1143
    %v1145 = vmul.f32 %v1140, 1.442695
    %v1146 = vpow.pop %v1145
    %v1147 = vmul.f32 %v1141, 1.442695
    %v1148 = vpow.pop %v1147
    %v1149 = vmul.f32 %v1142, 1.442695
    %v1150 = vpow.pop %v1149
    %v1151 = vsel %vm366, %v1144, 0.0
    %1152 = vadd.xlane.f32.xlu0 %v1151
    %v1153 = vpop.xlane.xlu0 %1152
    %v1154 = vsel %vm366, %v1146, 0.0
    %1155 = vadd.xlane.f32.xlu0 %v1154
    %v1156 = vpop.xlane.xlu0 %1155
    %v1157 = vsel %vm366, %v1148, 0.0
    %1158 = vadd.xlane.f32.xlu0 %v1157
    %v1159 = vpop.xlane.xlu0 %1158
    %v1160 = vsel %vm366, %v1150, 0.0
    %1161 = vadd.xlane.f32.xlu0 %v1160
    %v1162 = vpop.xlane.xlu0 %1161
    %v1163 = vrcp.pop %v1153
    %v1164 = vrcp.pop %v1156
    %v1165 = vrcp.pop %v1159
    %v1166 = vrcp.pop %v1162
    %v1167 = vmul.f32 %v1144, %v1163
    %v1168 = vmul.f32 %v1146, %v1164
    %v1169 = vmul.f32 %v1148, %v1165
    %v1170 = vmul.f32 %v1150, %v1166
    %1171 = vrot.lane.b32.xlu0 %v117, 96
    %v1172 = vpop.permute.xlu0 %1171
    %1173 = vrot.lane.b32.xlu0 %v122, 96
    %v1174 = vpop.permute.xlu0 %1173
    %1175 = vrot.lane.b32.xlu0 %v127, 96
    %v1176 = vpop.permute.xlu0 %1175
    %1177 = vrot.lane.b32.xlu0 %v132, 96
    %v1178 = vpop.permute.xlu0 %1177
    %v1184 = vsel %vm366, %v1167, 0
    %v1187 = vsel %vm366, %v1168, 0
    %v1190 = vsel %vm366, %v1169, 0
    %v1193 = vsel %vm366, %v1170, 0
    %1195 = vmatprep.subr.mxu0 0.0
    %1196 = vmatpush1.msra.mxu0 %v1172
    %1197 = vmatprep.subr.mxu0 0.0
    %1198 = vmatpush1.msra.mxu0 %v1174
    %1199 = vmatprep.subr.mxu0 0.0
    %1200 = vmatpush1.msra.mxu0 %v1176
    %1201 = vmatprep.subr.mxu0 0.0
    %1202 = vmatpush1.msra.mxu0 %v1178
    %1203 = vmatprep.subr.mxu0 0.0
    %1204 = vmatpush1.msra.mxu0 0.0
    %1205 = vmatprep.subr.mxu0 0.0
    %1206 = vmatpush1.msra.mxu0 0.0
    %1207 = vmatprep.subr.mxu0 0.0
    %1208 = vmatpush1.msra.mxu0 0.0
    %1209 = vmatprep.subr.mxu0 0.0
    %1210 = vmatpush1.msra.mxu0 0.0
    %1211 = vmatprep.subr.mxu0 0.0
    %1212 = vmatpush1.msra.mxu0 0.0
    %1213 = vmatprep.subr.mxu0 0.0
    %1214 = vmatpush1.msra.mxu0 0.0
    %1215 = vmatprep.subr.mxu0 0.0
    %1216 = vmatpush1.msra.mxu0 0.0
    %1217 = vmatprep.subr.mxu0 0.0
    %1218 = vmatpush1.msra.mxu0 0.0
    %1219 = vmatprep.subr.mxu0 0.0
    %1220 = vmatpush1.msra.mxu0 0.0
    %1221 = vmatprep.subr.mxu0 0.0
    %1222 = vmatpush1.msra.mxu0 0.0
    %1223 = vmatprep.subr.mxu0 0.0
    %1224 = vmatpush1.msra.mxu0 0.0
    %1225 = vmatprep.subr.mxu0 0.0
    %1226 = vmatpush1.msra.mxu0 0.0
    %1227 = vmatprep.subr.mxu0 0.0
    %1228 = vmatpush1.msra.mxu0 0.0
    %1229 = vmatprep.subr.mxu0 0.0
    %1230 = vmatpush1.msra.mxu0 0.0
    %1231 = vmatprep.subr.mxu0 0.0
    %1232 = vmatpush1.msra.mxu0 0.0
    %1233 = vmatprep.subr.mxu0 0.0
    %1234 = vmatpush1.msra.mxu0 0.0
    %1235 = vmatprep.subr.mxu0 0.0
    %1236 = vmatpush1.msra.mxu0 0.0
    %1237 = vmatprep.subr.mxu0 0.0
    %1238 = vmatpush1.msra.mxu0 0.0
    %1239 = vmatprep.subr.mxu0 0.0
    %1240 = vmatpush1.msra.mxu0 0.0
    %1241 = vmatprep.subr.mxu0 0.0
    %1242 = vmatpush1.msra.mxu0 0.0
    %1243 = vmatprep.subr.mxu0 0.0
    %1244 = vmatpush1.msra.mxu0 0.0
    %1245 = vmatprep.subr.mxu0 0.0
    %1246 = vmatpush1.msra.mxu0 0.0
    %1247 = vmatprep.subr.mxu0 0.0
    %1248 = vmatpush1.msra.mxu0 0.0
    %1249 = vmatprep.subr.mxu0 0.0
    %1250 = vmatpush1.msra.mxu0 0.0
    %1251 = vmatprep.subr.mxu0 0.0
    %1252 = vmatpush1.msra.mxu0 0.0
    %1253 = vmatprep.subr.mxu0 0.0
    %1254 = vmatpush1.msra.mxu0 0.0
    %1255 = vmatprep.subr.mxu0 0.0
    %1256 = vmatpush1.msra.mxu0 0.0
    %1257 = vmatprep.subr.mxu0 0.0
    %1258 = vmatpush1.msra.mxu0 0.0
    %1259 = vmatprep.mubr.f32.mxu0 0.0
    %1260 = vmatmul.mubr.f32.gmra.mrb[0].mxu0 %v1184
    %v1261 = vpop.f32.mrb[0].mxu0
    %v1262 = vadd.f32 0.0, %v1261
    %v1263 = vpop.f32.mrb[0].mxu0
    %1264 = vmatprep.mubr.f32.mxu0 0.0
    %1265 = vmatmul.mubr.f32.gmra.mrb[0].mxu0 %v1187
    %v1266 = vpop.f32.mrb[0].mxu0
    %v1267 = vadd.f32 0.0, %v1266
    %v1268 = vpop.f32.mrb[0].mxu0
    %1269 = vmatprep.mubr.f32.mxu0 0.0
    %1270 = vmatmul.mubr.f32.gmra.mrb[0].mxu0 %v1190
    %v1271 = vpop.f32.mrb[0].mxu0
    %v1272 = vadd.f32 0.0, %v1271
    %v1273 = vpop.f32.mrb[0].mxu0
    %1274 = vmatprep.mubr.f32.mxu0 0.0
    %1275 = vmatmul.mubr.f32.gmra.mrb[0].mxu0 %v1193
    %v1276 = vpop.f32.mrb[0].mxu0
    %v1277 = vadd.f32 0.0, %v1276
    %v1278 = vpop.f32.mrb[0].mxu0
    %1279 = vdwg.mxu0
    %1280 = vset.pattern.permute.xlu0 5
    %1281 = vperm.xlu0 %1280, %v215
    %v1282 = vpop.permute.xlu0 %1281
    %1284 = vset.pattern.permute.xlu0 5
    %1285 = vperm.xlu0 %1284, %v220
    %v1286 = vpop.permute.xlu0 %1285
    %1288 = vset.pattern.permute.xlu0 5
    %1289 = vperm.xlu0 %1288, %v225
    %v1290 = vpop.permute.xlu0 %1289
    %1292 = vset.pattern.permute.xlu0 5
    %1293 = vperm.xlu0 %1292, %v230
    %v1294 = vpop.permute.xlu0 %1293
    %v1296 = vlaneseq
    %v1297 = vshrl.u32 %v1296, 7
    %v1298 = vsub.s32 5, %v1297
    %v1299 = vrot.slane %v303, %v1298
    %v1300 = vadd.f32 %v1282, %v1299
    %v1301 = vadd.f32 %v1286, %v1299
    %v1302 = vadd.f32 %v1290, %v1299
    %v1303 = vadd.f32 %v1294, %v1299
    %vm1304 = vcmp.ge.f32.partialorder %v1300, 0.0
    %vm1305 = vcmp.ge.f32.partialorder %v1301, 0.0
    %vm1306 = vcmp.ge.f32.partialorder %v1302, 0.0
    %vm1307 = vcmp.ge.f32.partialorder %v1303, 0.0
    %v1308 = vmul.f32 %v1300, 0.2
    %v1309 = vmul.f32 %v1301, 0.2
    %v1310 = vmul.f32 %v1302, 0.2
    %v1311 = vmul.f32 %v1303, 0.2
    %v1312 = vsel %vm1304, %v1300, %v1308
    %v1313 = vsel %vm1305, %v1301, %v1309
    %v1314 = vsel %vm1306, %v1302, %v1310
    %v1315 = vsel %vm1307, %v1303, %v1311
    %v1316 = vadd.f32 %v1312, %v318
    %v1317 = vadd.f32 %v1313, %v319
    %v1318 = vadd.f32 %v1314, %v320
    %v1319 = vadd.f32 %v1315, %v321
    %v1320 = vsel %vm366, %v1316, -inf
    %1321 = vmax.xlane.f32.xlu0 %v1320
    %v1322 = vpop.xlane.xlu0 %1321
    %v1323 = vsel %vm366, %v1317, -inf
    %1324 = vmax.xlane.f32.xlu0 %v1323
    %v1325 = vpop.xlane.xlu0 %1324
    %v1326 = vsel %vm366, %v1318, -inf
    %1327 = vmax.xlane.f32.xlu0 %v1326
    %v1328 = vpop.xlane.xlu0 %1327
    %v1329 = vsel %vm366, %v1319, -inf
    %1330 = vmax.xlane.f32.xlu0 %v1329
    %v1331 = vpop.xlane.xlu0 %1330
    %v1332 = vsub.f32 %v1316, %v1322
    %v1333 = vsub.f32 %v1317, %v1325
    %v1334 = vsub.f32 %v1318, %v1328
    %v1335 = vsub.f32 %v1319, %v1331
    %v1336 = vmul.f32 %v1332, 1.442695
    %v1337 = vpow.pop %v1336
    %v1338 = vmul.f32 %v1333, 1.442695
    %v1339 = vpow.pop %v1338
    %v1340 = vmul.f32 %v1334, 1.442695
    %v1341 = vpow.pop %v1340
    %v1342 = vmul.f32 %v1335, 1.442695
    %v1343 = vpow.pop %v1342
    %v1344 = vsel %vm366, %v1337, 0.0
    %1345 = vadd.xlane.f32.xlu0 %v1344
    %v1346 = vpop.xlane.xlu0 %1345
    %v1347 = vsel %vm366, %v1339, 0.0
    %1348 = vadd.xlane.f32.xlu0 %v1347
    %v1349 = vpop.xlane.xlu0 %1348
    %v1350 = vsel %vm366, %v1341, 0.0
    %1351 = vadd.xlane.f32.xlu0 %v1350
    %v1352 = vpop.xlane.xlu0 %1351
    %v1353 = vsel %vm366, %v1343, 0.0
    %1354 = vadd.xlane.f32.xlu0 %v1353
    %v1355 = vpop.xlane.xlu0 %1354
    %v1356 = vrcp.pop %v1346
    %v1357 = vrcp.pop %v1349
    %v1358 = vrcp.pop %v1352
    %v1359 = vrcp.pop %v1355
    %v1360 = vmul.f32 %v1337, %v1356
    %v1361 = vmul.f32 %v1339, %v1357
    %v1362 = vmul.f32 %v1341, %v1358
    %v1363 = vmul.f32 %v1343, %v1359
    %1364 = vrot.lane.b32.xlu0 %v117, 88
    %v1365 = vpop.permute.xlu0 %1364
    %1366 = vrot.lane.b32.xlu0 %v122, 88
    %v1367 = vpop.permute.xlu0 %1366
    %1368 = vrot.lane.b32.xlu0 %v127, 88
    %v1369 = vpop.permute.xlu0 %1368
    %1370 = vrot.lane.b32.xlu0 %v132, 88
    %v1371 = vpop.permute.xlu0 %1370
    %v1377 = vsel %vm366, %v1360, 0
    %v1380 = vsel %vm366, %v1361, 0
    %v1383 = vsel %vm366, %v1362, 0
    %v1386 = vsel %vm366, %v1363, 0
    %1388 = vmatprep.subr.mxu0 0.0
    %1389 = vmatpush1.msra.mxu0 %v1365
    %1390 = vmatprep.subr.mxu0 0.0
    %1391 = vmatpush1.msra.mxu0 %v1367
    %1392 = vmatprep.subr.mxu0 0.0
    %1393 = vmatpush1.msra.mxu0 %v1369
    %1394 = vmatprep.subr.mxu0 0.0
    %1395 = vmatpush1.msra.mxu0 %v1371
    %1396 = vmatprep.subr.mxu0 0.0
    %1397 = vmatpush1.msra.mxu0 0.0
    %1398 = vmatprep.subr.mxu0 0.0
    %1399 = vmatpush1.msra.mxu0 0.0
    %1400 = vmatprep.subr.mxu0 0.0
    %1401 = vmatpush1.msra.mxu0 0.0
    %1402 = vmatprep.subr.mxu0 0.0
    %1403 = vmatpush1.msra.mxu0 0.0
    %1404 = vmatprep.subr.mxu0 0.0
    %1405 = vmatpush1.msra.mxu0 0.0
    %1406 = vmatprep.subr.mxu0 0.0
    %1407 = vmatpush1.msra.mxu0 0.0
    %1408 = vmatprep.subr.mxu0 0.0
    %1409 = vmatpush1.msra.mxu0 0.0
    %1410 = vmatprep.subr.mxu0 0.0
    %1411 = vmatpush1.msra.mxu0 0.0
    %1412 = vmatprep.subr.mxu0 0.0
    %1413 = vmatpush1.msra.mxu0 0.0
    %1414 = vmatprep.subr.mxu0 0.0
    %1415 = vmatpush1.msra.mxu0 0.0
    %1416 = vmatprep.subr.mxu0 0.0
    %1417 = vmatpush1.msra.mxu0 0.0
    %1418 = vmatprep.subr.mxu0 0.0
    %1419 = vmatpush1.msra.mxu0 0.0
    %1420 = vmatprep.subr.mxu0 0.0
    %1421 = vmatpush1.msra.mxu0 0.0
    %1422 = vmatprep.subr.mxu0 0.0
    %1423 = vmatpush1.msra.mxu0 0.0
    %1424 = vmatprep.subr.mxu0 0.0
    %1425 = vmatpush1.msra.mxu0 0.0
    %1426 = vmatprep.subr.mxu0 0.0
    %1427 = vmatpush1.msra.mxu0 0.0
    %1428 = vmatprep.subr.mxu0 0.0
    %1429 = vmatpush1.msra.mxu0 0.0
    %1430 = vmatprep.subr.mxu0 0.0
    %1431 = vmatpush1.msra.mxu0 0.0
    %1432 = vmatprep.subr.mxu0 0.0
    %1433 = vmatpush1.msra.mxu0 0.0
    %1434 = vmatprep.subr.mxu0 0.0
    %1435 = vmatpush1.msra.mxu0 0.0
    %1436 = vmatprep.subr.mxu0 0.0
    %1437 = vmatpush1.msra.mxu0 0.0
    %1438 = vmatprep.subr.mxu0 0.0
    %1439 = vmatpush1.msra.mxu0 0.0
    %1440 = vmatprep.subr.mxu0 0.0
    %1441 = vmatpush1.msra.mxu0 0.0
    %1442 = vmatprep.subr.mxu0 0.0
    %1443 = vmatpush1.msra.mxu0 0.0
    %1444 = vmatprep.subr.mxu0 0.0
    %1445 = vmatpush1.msra.mxu0 0.0
    %1446 = vmatprep.subr.mxu0 0.0
    %1447 = vmatpush1.msra.mxu0 0.0
    %1448 = vmatprep.subr.mxu0 0.0
    %1449 = vmatpush1.msra.mxu0 0.0
    %1450 = vmatprep.subr.mxu0 0.0
    %1451 = vmatpush1.msra.mxu0 0.0
    %1452 = vmatprep.mubr.f32.mxu0 0.0
    %1453 = vmatmul.mubr.f32.gmra.mrb[0].mxu0 %v1377
    %v1454 = vpop.f32.mrb[0].mxu0
    %v1455 = vadd.f32 0.0, %v1454
    %v1456 = vpop.f32.mrb[0].mxu0
    %1457 = vmatprep.mubr.f32.mxu0 0.0
    %1458 = vmatmul.mubr.f32.gmra.mrb[0].mxu0 %v1380
    %v1459 = vpop.f32.mrb[0].mxu0
    %v1460 = vadd.f32 0.0, %v1459
    %v1461 = vpop.f32.mrb[0].mxu0
    %1462 = vmatprep.mubr.f32.mxu0 0.0
    %1463 = vmatmul.mubr.f32.gmra.mrb[0].mxu0 %v1383
    %v1464 = vpop.f32.mrb[0].mxu0
    %v1465 = vadd.f32 0.0, %v1464
    %v1466 = vpop.f32.mrb[0].mxu0
    %1467 = vmatprep.mubr.f32.mxu0 0.0
    %1468 = vmatmul.mubr.f32.gmra.mrb[0].mxu0 %v1386
    %v1469 = vpop.f32.mrb[0].mxu0
    %v1470 = vadd.f32 0.0, %v1469
    %v1471 = vpop.f32.mrb[0].mxu0
    %1472 = vdwg.mxu0
    %1473 = vset.pattern.permute.xlu0 6
    %1474 = vperm.xlu0 %1473, %v215
    %v1475 = vpop.permute.xlu0 %1474
    %1477 = vset.pattern.permute.xlu0 6
    %1478 = vperm.xlu0 %1477, %v220
    %v1479 = vpop.permute.xlu0 %1478
    %1481 = vset.pattern.permute.xlu0 6
    %1482 = vperm.xlu0 %1481, %v225
    %v1483 = vpop.permute.xlu0 %1482
    %1485 = vset.pattern.permute.xlu0 6
    %1486 = vperm.xlu0 %1485, %v230
    %v1487 = vpop.permute.xlu0 %1486
    %v1489 = vlaneseq
    %v1490 = vshrl.u32 %v1489, 7
    %v1491 = vsub.s32 6, %v1490
    %v1492 = vrot.slane %v303, %v1491
    %v1493 = vadd.f32 %v1475, %v1492
    %v1494 = vadd.f32 %v1479, %v1492
    %v1495 = vadd.f32 %v1483, %v1492
    %v1496 = vadd.f32 %v1487, %v1492
    %vm1497 = vcmp.ge.f32.partialorder %v1493, 0.0
    %vm1498 = vcmp.ge.f32.partialorder %v1494, 0.0
    %vm1499 = vcmp.ge.f32.partialorder %v1495, 0.0
    %vm1500 = vcmp.ge.f32.partialorder %v1496, 0.0
    %v1501 = vmul.f32 %v1493, 0.2
    %v1502 = vmul.f32 %v1494, 0.2
    %v1503 = vmul.f32 %v1495, 0.2
    %v1504 = vmul.f32 %v1496, 0.2
    %v1505 = vsel %vm1497, %v1493, %v1501
    %v1506 = vsel %vm1498, %v1494, %v1502
    %v1507 = vsel %vm1499, %v1495, %v1503
    %v1508 = vsel %vm1500, %v1496, %v1504
    %v1509 = vadd.f32 %v1505, %v318
    %v1510 = vadd.f32 %v1506, %v319
    %v1511 = vadd.f32 %v1507, %v320
    %v1512 = vadd.f32 %v1508, %v321
    %v1513 = vsel %vm366, %v1509, -inf
    %1514 = vmax.xlane.f32.xlu0 %v1513
    %v1515 = vpop.xlane.xlu0 %1514
    %v1516 = vsel %vm366, %v1510, -inf
    %1517 = vmax.xlane.f32.xlu0 %v1516
    %v1518 = vpop.xlane.xlu0 %1517
    %v1519 = vsel %vm366, %v1511, -inf
    %1520 = vmax.xlane.f32.xlu0 %v1519
    %v1521 = vpop.xlane.xlu0 %1520
    %v1522 = vsel %vm366, %v1512, -inf
    %1523 = vmax.xlane.f32.xlu0 %v1522
    %v1524 = vpop.xlane.xlu0 %1523
    %v1525 = vsub.f32 %v1509, %v1515
    %v1526 = vsub.f32 %v1510, %v1518
    %v1527 = vsub.f32 %v1511, %v1521
    %v1528 = vsub.f32 %v1512, %v1524
    %v1529 = vmul.f32 %v1525, 1.442695
    %v1530 = vpow.pop %v1529
    %v1531 = vmul.f32 %v1526, 1.442695
    %v1532 = vpow.pop %v1531
    %v1533 = vmul.f32 %v1527, 1.442695
    %v1534 = vpow.pop %v1533
    %v1535 = vmul.f32 %v1528, 1.442695
    %v1536 = vpow.pop %v1535
    %v1537 = vsel %vm366, %v1530, 0.0
    %1538 = vadd.xlane.f32.xlu0 %v1537
    %v1539 = vpop.xlane.xlu0 %1538
    %v1540 = vsel %vm366, %v1532, 0.0
    %1541 = vadd.xlane.f32.xlu0 %v1540
    %v1542 = vpop.xlane.xlu0 %1541
    %v1543 = vsel %vm366, %v1534, 0.0
    %1544 = vadd.xlane.f32.xlu0 %v1543
    %v1545 = vpop.xlane.xlu0 %1544
    %v1546 = vsel %vm366, %v1536, 0.0
    %1547 = vadd.xlane.f32.xlu0 %v1546
    %v1548 = vpop.xlane.xlu0 %1547
    %v1549 = vrcp.pop %v1539
    %v1550 = vrcp.pop %v1542
    %v1551 = vrcp.pop %v1545
    %v1552 = vrcp.pop %v1548
    %v1553 = vmul.f32 %v1530, %v1549
    %v1554 = vmul.f32 %v1532, %v1550
    %v1555 = vmul.f32 %v1534, %v1551
    %v1556 = vmul.f32 %v1536, %v1552
    %1557 = vrot.lane.b32.xlu0 %v117, 80
    %v1558 = vpop.permute.xlu0 %1557
    %1559 = vrot.lane.b32.xlu0 %v122, 80
    %v1560 = vpop.permute.xlu0 %1559
    %1561 = vrot.lane.b32.xlu0 %v127, 80
    %v1562 = vpop.permute.xlu0 %1561
    %1563 = vrot.lane.b32.xlu0 %v132, 80
    %v1564 = vpop.permute.xlu0 %1563
    %v1570 = vsel %vm366, %v1553, 0
    %v1573 = vsel %vm366, %v1554, 0
    %v1576 = vsel %vm366, %v1555, 0
    %v1579 = vsel %vm366, %v1556, 0
    %1581 = vmatprep.subr.mxu0 0.0
    %1582 = vmatpush1.msra.mxu0 %v1558
    %1583 = vmatprep.subr.mxu0 0.0
    %1584 = vmatpush1.msra.mxu0 %v1560
    %1585 = vmatprep.subr.mxu0 0.0
    %1586 = vmatpush1.msra.mxu0 %v1562
    %1587 = vmatprep.subr.mxu0 0.0
    %1588 = vmatpush1.msra.mxu0 %v1564
    %1589 = vmatprep.subr.mxu0 0.0
    %1590 = vmatpush1.msra.mxu0 0.0
    %1591 = vmatprep.subr.mxu0 0.0
    %1592 = vmatpush1.msra.mxu0 0.0
    %1593 = vmatprep.subr.mxu0 0.0
    %1594 = vmatpush1.msra.mxu0 0.0
    %1595 = vmatprep.subr.mxu0 0.0
    %1596 = vmatpush1.msra.mxu0 0.0
    %1597 = vmatprep.subr.mxu0 0.0
    %1598 = vmatpush1.msra.mxu0 0.0
    %1599 = vmatprep.subr.mxu0 0.0
    %1600 = vmatpush1.msra.mxu0 0.0
    %1601 = vmatprep.subr.mxu0 0.0
    %1602 = vmatpush1.msra.mxu0 0.0
    %1603 = vmatprep.subr.mxu0 0.0
    %1604 = vmatpush1.msra.mxu0 0.0
    %1605 = vmatprep.subr.mxu0 0.0
    %1606 = vmatpush1.msra.mxu0 0.0
    %1607 = vmatprep.subr.mxu0 0.0
    %1608 = vmatpush1.msra.mxu0 0.0
    %1609 = vmatprep.subr.mxu0 0.0
    %1610 = vmatpush1.msra.mxu0 0.0
    %1611 = vmatprep.subr.mxu0 0.0
    %1612 = vmatpush1.msra.mxu0 0.0
    %1613 = vmatprep.subr.mxu0 0.0
    %1614 = vmatpush1.msra.mxu0 0.0
    %1615 = vmatprep.subr.mxu0 0.0
    %1616 = vmatpush1.msra.mxu0 0.0
    %1617 = vmatprep.subr.mxu0 0.0
    %1618 = vmatpush1.msra.mxu0 0.0
    %1619 = vmatprep.subr.mxu0 0.0
    %1620 = vmatpush1.msra.mxu0 0.0
    %1621 = vmatprep.subr.mxu0 0.0
    %1622 = vmatpush1.msra.mxu0 0.0
    %1623 = vmatprep.subr.mxu0 0.0
    %1624 = vmatpush1.msra.mxu0 0.0
    %1625 = vmatprep.subr.mxu0 0.0
    %1626 = vmatpush1.msra.mxu0 0.0
    %1627 = vmatprep.subr.mxu0 0.0
    %1628 = vmatpush1.msra.mxu0 0.0
    %1629 = vmatprep.subr.mxu0 0.0
    %1630 = vmatpush1.msra.mxu0 0.0
    %1631 = vmatprep.subr.mxu0 0.0
    %1632 = vmatpush1.msra.mxu0 0.0
    %1633 = vmatprep.subr.mxu0 0.0
    %1634 = vmatpush1.msra.mxu0 0.0
    %1635 = vmatprep.subr.mxu0 0.0
    %1636 = vmatpush1.msra.mxu0 0.0
    %1637 = vmatprep.subr.mxu0 0.0
    %1638 = vmatpush1.msra.mxu0 0.0
    %1639 = vmatprep.subr.mxu0 0.0
    %1640 = vmatpush1.msra.mxu0 0.0
    %1641 = vmatprep.subr.mxu0 0.0
    %1642 = vmatpush1.msra.mxu0 0.0
    %1643 = vmatprep.subr.mxu0 0.0
    %1644 = vmatpush1.msra.mxu0 0.0
    %1645 = vmatprep.mubr.f32.mxu0 0.0
    %1646 = vmatmul.mubr.f32.gmra.mrb[0].mxu0 %v1570
    %v1647 = vpop.f32.mrb[0].mxu0
    %v1648 = vadd.f32 0.0, %v1647
    %v1649 = vpop.f32.mrb[0].mxu0
    %1650 = vmatprep.mubr.f32.mxu0 0.0
    %1651 = vmatmul.mubr.f32.gmra.mrb[0].mxu0 %v1573
    %v1652 = vpop.f32.mrb[0].mxu0
    %v1653 = vadd.f32 0.0, %v1652
    %v1654 = vpop.f32.mrb[0].mxu0
    %1655 = vmatprep.mubr.f32.mxu0 0.0
    %1656 = vmatmul.mubr.f32.gmra.mrb[0].mxu0 %v1576
    %v1657 = vpop.f32.mrb[0].mxu0
    %v1658 = vadd.f32 0.0, %v1657
    %v1659 = vpop.f32.mrb[0].mxu0
    %1660 = vmatprep.mubr.f32.mxu0 0.0
    %1661 = vmatmul.mubr.f32.gmra.mrb[0].mxu0 %v1579
    %v1662 = vpop.f32.mrb[0].mxu0
    %v1663 = vadd.f32 0.0, %v1662
    %v1664 = vpop.f32.mrb[0].mxu0
    %1665 = vdwg.mxu0
    %1666 = vset.pattern.permute.xlu0 7
    %1667 = vperm.xlu0 %1666, %v215
    %v1668 = vpop.permute.xlu0 %1667
    %1670 = vset.pattern.permute.xlu0 7
    %1671 = vperm.xlu0 %1670, %v220
    %v1672 = vpop.permute.xlu0 %1671
    %1674 = vset.pattern.permute.xlu0 7
    %1675 = vperm.xlu0 %1674, %v225
    %v1676 = vpop.permute.xlu0 %1675
    %1678 = vset.pattern.permute.xlu0 7
    %1679 = vperm.xlu0 %1678, %v230
    %v1680 = vpop.permute.xlu0 %1679
    %v1682 = vlaneseq
    %v1683 = vshrl.u32 %v1682, 7
    %v1684 = vsub.s32 7, %v1683
    %v1685 = vrot.slane %v303, %v1684
    %v1686 = vadd.f32 %v1668, %v1685
    %v1687 = vadd.f32 %v1672, %v1685
    %v1688 = vadd.f32 %v1676, %v1685
    %v1689 = vadd.f32 %v1680, %v1685
    %vm1690 = vcmp.ge.f32.partialorder %v1686, 0.0
    %vm1691 = vcmp.ge.f32.partialorder %v1687, 0.0
    %vm1692 = vcmp.ge.f32.partialorder %v1688, 0.0
    %vm1693 = vcmp.ge.f32.partialorder %v1689, 0.0
    %v1694 = vmul.f32 %v1686, 0.2
    %v1695 = vmul.f32 %v1687, 0.2
    %v1696 = vmul.f32 %v1688, 0.2
    %v1697 = vmul.f32 %v1689, 0.2
    %v1698 = vsel %vm1690, %v1686, %v1694
    %v1699 = vsel %vm1691, %v1687, %v1695
    %v1700 = vsel %vm1692, %v1688, %v1696
    %v1701 = vsel %vm1693, %v1689, %v1697
    %v1702 = vadd.f32 %v1698, %v318
    %v1703 = vadd.f32 %v1699, %v319
    %v1704 = vadd.f32 %v1700, %v320
    %v1705 = vadd.f32 %v1701, %v321
    %v1706 = vsel %vm366, %v1702, -inf
    %1707 = vmax.xlane.f32.xlu0 %v1706
    %v1708 = vpop.xlane.xlu0 %1707
    %v1709 = vsel %vm366, %v1703, -inf
    %1710 = vmax.xlane.f32.xlu0 %v1709
    %v1711 = vpop.xlane.xlu0 %1710
    %v1712 = vsel %vm366, %v1704, -inf
    %1713 = vmax.xlane.f32.xlu0 %v1712
    %v1714 = vpop.xlane.xlu0 %1713
    %v1715 = vsel %vm366, %v1705, -inf
    %1716 = vmax.xlane.f32.xlu0 %v1715
    %v1717 = vpop.xlane.xlu0 %1716
    %v1718 = vsub.f32 %v1702, %v1708
    %v1719 = vsub.f32 %v1703, %v1711
    %v1720 = vsub.f32 %v1704, %v1714
    %v1721 = vsub.f32 %v1705, %v1717
    %v1722 = vmul.f32 %v1718, 1.442695
    %v1723 = vpow.pop %v1722
    %v1724 = vmul.f32 %v1719, 1.442695
    %v1725 = vpow.pop %v1724
    %v1726 = vmul.f32 %v1720, 1.442695
    %v1727 = vpow.pop %v1726
    %v1728 = vmul.f32 %v1721, 1.442695
    %v1729 = vpow.pop %v1728
    %v1730 = vsel %vm366, %v1723, 0.0
    %1731 = vadd.xlane.f32.xlu0 %v1730
    %v1732 = vpop.xlane.xlu0 %1731
    %v1733 = vsel %vm366, %v1725, 0.0
    %1734 = vadd.xlane.f32.xlu0 %v1733
    %v1735 = vpop.xlane.xlu0 %1734
    %v1736 = vsel %vm366, %v1727, 0.0
    %1737 = vadd.xlane.f32.xlu0 %v1736
    %v1738 = vpop.xlane.xlu0 %1737
    %v1739 = vsel %vm366, %v1729, 0.0
    %1740 = vadd.xlane.f32.xlu0 %v1739
    %v1741 = vpop.xlane.xlu0 %1740
    %v1742 = vrcp.pop %v1732
    %v1743 = vrcp.pop %v1735
    %v1744 = vrcp.pop %v1738
    %v1745 = vrcp.pop %v1741
    %v1746 = vmul.f32 %v1723, %v1742
    %v1747 = vmul.f32 %v1725, %v1743
    %v1748 = vmul.f32 %v1727, %v1744
    %v1749 = vmul.f32 %v1729, %v1745
    %1750 = vrot.lane.b32.xlu0 %v117, 72
    %v1751 = vpop.permute.xlu0 %1750
    %1752 = vrot.lane.b32.xlu0 %v122, 72
    %v1753 = vpop.permute.xlu0 %1752
    %1754 = vrot.lane.b32.xlu0 %v127, 72
    %v1755 = vpop.permute.xlu0 %1754
    %1756 = vrot.lane.b32.xlu0 %v132, 72
    %v1757 = vpop.permute.xlu0 %1756
    %v1763 = vsel %vm366, %v1746, 0
    %v1766 = vsel %vm366, %v1747, 0
    %v1769 = vsel %vm366, %v1748, 0
    %v1772 = vsel %vm366, %v1749, 0
    %1774 = vmatprep.subr.mxu0 0.0
    %1775 = vmatpush1.msra.mxu0 %v1751
    %1776 = vmatprep.subr.mxu0 0.0
    %1777 = vmatpush1.msra.mxu0 %v1753
    %1778 = vmatprep.subr.mxu0 0.0
    %1779 = vmatpush1.msra.mxu0 %v1755
    %1780 = vmatprep.subr.mxu0 0.0
    %1781 = vmatpush1.msra.mxu0 %v1757
    %1782 = vmatprep.subr.mxu0 0.0
    %1783 = vmatpush1.msra.mxu0 0.0
    %1784 = vmatprep.subr.mxu0 0.0
    %1785 = vmatpush1.msra.mxu0 0.0
    %1786 = vmatprep.subr.mxu0 0.0
    %1787 = vmatpush1.msra.mxu0 0.0
    %1788 = vmatprep.subr.mxu0 0.0
    %1789 = vmatpush1.msra.mxu0 0.0
    %1790 = vmatprep.subr.mxu0 0.0
    %1791 = vmatpush1.msra.mxu0 0.0
    %1792 = vmatprep.subr.mxu0 0.0
    %1793 = vmatpush1.msra.mxu0 0.0
    %1794 = vmatprep.subr.mxu0 0.0
    %1795 = vmatpush1.msra.mxu0 0.0
    %1796 = vmatprep.subr.mxu0 0.0
    %1797 = vmatpush1.msra.mxu0 0.0
    %1798 = vmatprep.subr.mxu0 0.0
    %1799 = vmatpush1.msra.mxu0 0.0
    %1800 = vmatprep.subr.mxu0 0.0
    %1801 = vmatpush1.msra.mxu0 0.0
    %1802 = vmatprep.subr.mxu0 0.0
    %1803 = vmatpush1.msra.mxu0 0.0
    %1804 = vmatprep.subr.mxu0 0.0
    %1805 = vmatpush1.msra.mxu0 0.0
    %1806 = vmatprep.subr.mxu0 0.0
    %1807 = vmatpush1.msra.mxu0 0.0
    %1808 = vmatprep.subr.mxu0 0.0
    %1809 = vmatpush1.msra.mxu0 0.0
    %1810 = vmatprep.subr.mxu0 0.0
    %1811 = vmatpush1.msra.mxu0 0.0
    %1812 = vmatprep.subr.mxu0 0.0
    %1813 = vmatpush1.msra.mxu0 0.0
    %1814 = vmatprep.subr.mxu0 0.0
    %1815 = vmatpush1.msra.mxu0 0.0
    %1816 = vmatprep.subr.mxu0 0.0
    %1817 = vmatpush1.msra.mxu0 0.0
    %1818 = vmatprep.subr.mxu0 0.0
    %1819 = vmatpush1.msra.mxu0 0.0
    %1820 = vmatprep.subr.mxu0 0.0
    %1821 = vmatpush1.msra.mxu0 0.0
    %1822 = vmatprep.subr.mxu0 0.0
    %1823 = vmatpush1.msra.mxu0 0.0
    %1824 = vmatprep.subr.mxu0 0.0
    %1825 = vmatpush1.msra.mxu0 0.0
    %1826 = vmatprep.subr.mxu0 0.0
    %1827 = vmatpush1.msra.mxu0 0.0
    %1828 = vmatprep.subr.mxu0 0.0
    %1829 = vmatpush1.msra.mxu0 0.0
    %1830 = vmatprep.subr.mxu0 0.0
    %1831 = vmatpush1.msra.mxu0 0.0
    %1832 = vmatprep.subr.mxu0 0.0
    %1833 = vmatpush1.msra.mxu0 0.0
    %1834 = vmatprep.subr.mxu0 0.0
    %1835 = vmatpush1.msra.mxu0 0.0
    %1836 = vmatprep.subr.mxu0 0.0
    %1837 = vmatpush1.msra.mxu0 0.0
    %1838 = vmatprep.mubr.f32.mxu0 0.0
    %1839 = vmatmul.mubr.f32.gmra.mrb[0].mxu0 %v1763
    %v1840 = vpop.f32.mrb[0].mxu0
    %v1841 = vadd.f32 0.0, %v1840
    %v1842 = vpop.f32.mrb[0].mxu0
    %1843 = vmatprep.mubr.f32.mxu0 0.0
    %1844 = vmatmul.mubr.f32.gmra.mrb[0].mxu0 %v1766
    %v1845 = vpop.f32.mrb[0].mxu0
    %v1846 = vadd.f32 0.0, %v1845
    %v1847 = vpop.f32.mrb[0].mxu0
    %1848 = vmatprep.mubr.f32.mxu0 0.0
    %1849 = vmatmul.mubr.f32.gmra.mrb[0].mxu0 %v1769
    %v1850 = vpop.f32.mrb[0].mxu0
    %v1851 = vadd.f32 0.0, %v1850
    %v1852 = vpop.f32.mrb[0].mxu0
    %1853 = vmatprep.mubr.f32.mxu0 0.0
    %1854 = vmatmul.mubr.f32.gmra.mrb[0].mxu0 %v1772
    %v1855 = vpop.f32.mrb[0].mxu0
    %v1856 = vadd.f32 0.0, %v1855
    %v1857 = vpop.f32.mrb[0].mxu0
    %1858 = vdwg.mxu0
    %1863 = vrot.lane.b32.xlu0 %v683, 8
    %v1864 = vpop.permute.xlu0 %1863
    %1865 = vrot.lane.b32.xlu0 %v688, 8
    %v1866 = vpop.permute.xlu0 %1865
    %1867 = vrot.lane.b32.xlu0 %v693, 8
    %v1868 = vpop.permute.xlu0 %1867
    %1869 = vrot.lane.b32.xlu0 %v698, 8
    %v1870 = vpop.permute.xlu0 %1869
    %1879 = vrot.lane.b32.xlu0 %v876, 16
    %v1880 = vpop.permute.xlu0 %1879
    %1881 = vrot.lane.b32.xlu0 %v881, 16
    %v1882 = vpop.permute.xlu0 %1881
    %1883 = vrot.lane.b32.xlu0 %v886, 16
    %v1884 = vpop.permute.xlu0 %1883
    %1885 = vrot.lane.b32.xlu0 %v891, 16
    %v1886 = vpop.permute.xlu0 %1885
    %1895 = vrot.lane.b32.xlu0 %v1069, 24
    %v1896 = vpop.permute.xlu0 %1895
    %1897 = vrot.lane.b32.xlu0 %v1074, 24
    %v1898 = vpop.permute.xlu0 %1897
    %1899 = vrot.lane.b32.xlu0 %v1079, 24
    %v1900 = vpop.permute.xlu0 %1899
    %1901 = vrot.lane.b32.xlu0 %v1084, 24
    %v1902 = vpop.permute.xlu0 %1901
    %1911 = vrot.lane.b32.xlu0 %v1262, 32
    %v1912 = vpop.permute.xlu0 %1911
    %1913 = vrot.lane.b32.xlu0 %v1267, 32
    %v1914 = vpop.permute.xlu0 %1913
    %1915 = vrot.lane.b32.xlu0 %v1272, 32
    %v1916 = vpop.permute.xlu0 %1915
    %1917 = vrot.lane.b32.xlu0 %v1277, 32
    %v1918 = vpop.permute.xlu0 %1917
    %1927 = vrot.lane.b32.xlu0 %v1455, 40
    %v1928 = vpop.permute.xlu0 %1927
    %1929 = vrot.lane.b32.xlu0 %v1460, 40
    %v1930 = vpop.permute.xlu0 %1929
    %1931 = vrot.lane.b32.xlu0 %v1465, 40
    %v1932 = vpop.permute.xlu0 %1931
    %1933 = vrot.lane.b32.xlu0 %v1470, 40
    %v1934 = vpop.permute.xlu0 %1933
    %1943 = vrot.lane.b32.xlu0 %v1648, 48
    %v1944 = vpop.permute.xlu0 %1943
    %1945 = vrot.lane.b32.xlu0 %v1653, 48
    %v1946 = vpop.permute.xlu0 %1945
    %1947 = vrot.lane.b32.xlu0 %v1658, 48
    %v1948 = vpop.permute.xlu0 %1947
    %1949 = vrot.lane.b32.xlu0 %v1663, 48
    %v1950 = vpop.permute.xlu0 %1949
    %1959 = vrot.lane.b32.xlu0 %v1841, 56
    %v1960 = vpop.permute.xlu0 %1959
    %1961 = vrot.lane.b32.xlu0 %v1846, 56
    %v1962 = vpop.permute.xlu0 %1961
    %1963 = vrot.lane.b32.xlu0 %v1851, 56
    %v1964 = vpop.permute.xlu0 %1963
    %1965 = vrot.lane.b32.xlu0 %v1856, 56
    %v1966 = vpop.permute.xlu0 %1965
    %vm1971 = vcmask 64512
    %v1972 = vsel %vm1971, %v490, %v1864
    %v1973 = vsel %vm1971, %v495, %v1866
    %v1974 = vsel %vm1971, %v500, %v1868
    %v1975 = vsel %vm1971, %v505, %v1870
    %v1976 = vsel %vm37, %v1972, %v1880
    %v1977 = vsel %vm37, %v1973, %v1882
    %v1978 = vsel %vm37, %v1974, %v1884
    %v1979 = vsel %vm37, %v1975, %v1886
    %vm1980 = vcmask 195584
    %v1981 = vsel %vm1980, %v1976, %v1896
    %v1982 = vsel %vm1980, %v1977, %v1898
    %v1983 = vsel %vm1980, %v1978, %v1900
    %v1984 = vsel %vm1980, %v1979, %v1902
    %v1985 = vsel %vm366, %v1981, %v1912
    %v1986 = vsel %vm366, %v1982, %v1914
    %v1987 = vsel %vm366, %v1983, %v1916
    %v1988 = vsel %vm366, %v1984, %v1918
    %vm1989 = vcmask 326656
    %v1990 = vsel %vm1989, %v1985, %v1928
    %v1991 = vsel %vm1989, %v1986, %v1930
    %v1992 = vsel %vm1989, %v1987, %v1932
    %v1993 = vsel %vm1989, %v1988, %v1934
    %vm1994 = vcmask 392192
    %v1995 = vsel %vm1994, %v1990, %v1944
    %v1996 = vsel %vm1994, %v1991, %v1946
    %v1997 = vsel %vm1994, %v1992, %v1948
    %v1998 = vsel %vm1994, %v1993, %v1950
    %vm1999 = vcmask 457728
    %v2000 = vsel %vm1999, %v1995, %v1960
    %v2001 = vsel %vm1999, %v1996, %v1962
    %v2002 = vsel %vm1999, %v1997, %v1964
    %v2003 = vsel %vm1999, %v1998, %v1966
    %2004 = vst.msk [vmem:[#allocation2] sm:$0xff] %vm135, %v2000
    %2005 = vst.msk [vmem:[#allocation2 + $0x8] sm:$0xff] %vm135, %v2001
    %2006 = vst.msk [vmem:[#allocation2 + $0x10] sm:$0xff] %vm135, %v2002
    %2007 = vst.msk [vmem:[#allocation2 + $0x18] sm:$0xff] %vm135, %v2003
    // Predicated region
    $region22: #{tpu_custom_call.1} parent=1 // pred_check
      _
    $region23: #{tpu_custom_call.1} parent=1 // pred_check_branch
      %2009 = sbr.rel (0) target = $region25
    $region24: #{tpu_custom_call.1} parent=1 // pred_region
      %s2011 = ssub.s32 512, 512
      %2012 = vsyncadd [#allocation3], %s2011
      %s2013 = sshll.u32 [#allocation2], 4
      %s2014 = int_to_ptr.vmem [resolvable:$true] %s2013
      %2019 = dma.vmem_to_hbm [thread:$0]  %s2014, 512, %s5, [#allocation3], 128, 128, 8
    $region25: #{tpu_custom_call.1} parent=1 // pred_fallthru
      _
    // Predicated region
    $region26: #{tpu_custom_call.1} parent=1 // pred_check
      _
    $region27: #{tpu_custom_call.1} parent=1 // pred_check_branch
      %2021 = sbr.rel (0) target = $region29
    $region28: #{tpu_custom_call.1} parent=1 // pred_region
      %2022 = dma.done [#allocation3], 512
    $region29: #{tpu_custom_call.1} parent=1 // pred_fallthru
      _
    %2023 = vsyncpa [#allocation3], 1

</llo_original>
